<compile_context>
chip_gen: v6e
topology: v6e:2x2x1
jax: 0.10.0
libtpu: 0.0.40
codegen_flags: <defaults>
</compile_context>

<pallas_src>
import math

import jax
import jax.numpy as jnp
from jax.experimental import pallas as pl
from jax.experimental.pallas import tpu as pltpu

_INV_SQRT2 = 0.7071067811865476


def _ff_kernel(xh_ref, wd_ref, w1_ref, b1_ref, w2_ref, b2_ref, w3_ref, b3_ref, o_ref):
    THp2, Wp2, Cp = xh_ref.shape
    TH, W = THp2 - 2, Wp2 - 2
    TD = TH * W

    xh = xh_ref[...]                       # (TH+2, W+2, Cp) f32, halo'd + zero padded
    wd = wd_ref[...]                       # (9, Cp) f32 depthwise weights (kh*3+kw)

    # Depthwise 3x3 conv (groups=C, padding baked into the halo): 9-tap VPU MAC.
    # The depthwise bias is folded into b1 downstream.  The center tap doubles as
    # the residual input below.
    center = xh[1:TH + 1, 1:W + 1, :]
    acc = center * wd[4]
    for kh in range(3):
        for kw in range(3):
            if kh == 1 and kw == 1:
                continue
            acc = acc + xh[kh:kh + TH, kw:kw + W, :] * wd[3 * kh + kw]

    a2 = acc.reshape(TD, Cp).astype(jnp.bfloat16)

    # point conv C -> 256 (BN scale/shift + depthwise bias folded into w1/b1)
    y1 = jnp.dot(a2, w1_ref[...], preferred_element_type=jnp.float32) + b1_ref[...]

    # conv 256 -> 512 + exact GELU (erf form, torch.nn.GELU default)
    y2 = jnp.dot(y1.astype(jnp.bfloat16), w2_ref[...],
                 preferred_element_type=jnp.float32) + b2_ref[...]
    y2 = 0.5 * y2 * (1.0 + jax.lax.erf(y2 * _INV_SQRT2))

    # conv 512 -> C
    y3 = jnp.dot(y2.astype(jnp.bfloat16), w3_ref[...],
                 preferred_element_type=jnp.float32) + b3_ref[...]

    # residual: the un-padded center of the halo block is the original x tile
    o_ref[...] = center.reshape(TD, Cp) + y3


def _choose_row_tile(H, W, max_tokens=1024):
    """Largest divisor TH of H with TH*W <= max_tokens (>=1).  Keeps intermediates and
    the double-buffered VMEM blocks small enough for the scoped-VMEM default."""
    best = 1
    for th in range(1, H + 1):
        if H % th == 0 and th * W <= max_tokens:
            best = th
    return best


def feedforward_forward(x, params, *, max_tile_tokens=1024):
    """x: (B, D, C) float32 with D a perfect square.  Returns (B, D, C) float32."""
    B, D, C = x.shape
    H = int(round(math.sqrt(D)))
    assert H * H == D, "sequence length must be a perfect square"
    W = H

    wd, bd, w1, b1, bns, bnb, w2, b2, w3, b3 = params

    # ---- lane-dense channel padding ---------------------------------------------
    Cp = max(128, ((C + 127) // 128) * 128)

    # ---- plain-JAX layout plumbing: one fused pad + per-tile halo blocks ---------
    TH = _choose_row_tile(H, W, max_tile_tokens)
    nT = H // TH
    TD = TH * W

    xpad = jnp.pad(x.reshape(B, H, W, C),
                   ((0, 0), (1, 1), (1, 1), (0, Cp - C)))        # (B, H+2, W+2, Cp)
    # (B, nT, TH+2, W+2, Cp): each row tile carries its own 1-row halo
    xh = jnp.stack([xpad[:, r * TH:r * TH + TH + 2] for r in range(nT)], axis=1)

    # ---- fold BatchNorm (eval, running stats) and depthwise bias into w1/b1 ------
    # TODO(synk): PyTorch default is training mode (batch statistics); eval-mode
    # running-stat semantics are implemented here instead.
    w1f = w1 * bns                                    # (C, 256) * (1, 256)
    b1f = b1 * bns + bnb + bd @ w1f                   # depthwise bias folded in too
    # NOTE: wd row k corresponds to PyTorch depth_conv.weight[:, 0, k//3, k%3].
    wd_p = jnp.pad(wd, ((0, 0), (0, Cp - C)))         # (9, Cp)
    w1_p = jnp.pad(w1f, ((0, Cp - C), (0, 0)))        # (Cp, 256)
    w3_p = jnp.pad(w3, ((0, 0), (0, Cp - C)))         # (512, Cp)
    b3_p = jnp.pad(b3, ((0, 0), (0, Cp - C)))         # (1, Cp)

    # matmul operands in bf16 (f32 accumulation inside the kernel)
    w1_bf = w1_p.astype(jnp.bfloat16)
    w2_bf = w2.astype(jnp.bfloat16)
    w3_bf = w3_p.astype(jnp.bfloat16)

    def const_spec(arr):
        nd = arr.ndim
        return pl.BlockSpec(arr.shape, lambda r, b, _nd=nd: (0,) * _nd)

    grid_spec = pltpu.PrefetchScalarGridSpec(
        num_scalar_prefetch=0,
        grid=(nT, B),                                  # token tiles leading, all parallel
        in_specs=[
            pl.BlockSpec((None, None, TH + 2, W + 2, Cp),
                         lambda r, b: (b, r, 0, 0, 0)),            # halo'd input tile
            const_spec(wd_p),                                       # resident weights
            const_spec(w1_bf), const_spec(b1f),
            const_spec(w2_bf), const_spec(b2),
            const_spec(w3_bf), const_spec(b3_p),
        ],
        out_specs=pl.BlockSpec((None, None, TD, Cp), lambda r, b: (b, r, 0, 0)),
    )

    out = pl.pallas_call(
        _ff_kernel,
        out_shape=jax.ShapeDtypeStruct((B, nT, TD, Cp), jnp.float32),
        grid_spec=grid_spec,
        compiler_params=pltpu.CompilerParams(
            dimension_semantics=("parallel", "parallel"),
            vmem_limit_bytes=32 * 1024 * 1024,
        ),
    )(xh, wd_p, w1_bf, b1f, w2_bf, b2, w3_bf, b3_p)

    # drop channel padding, back to (B, D, C)
    return out.reshape(B, D, Cp)[:, :, :C]


def _reference(x, params):
    """Pure-JAX reference (f32) of the PyTorch forward (eval-mode BN)."""
    wd, bd, w1, b1, bns, bnb, w2, b2, w3, b3 = params
    B, D, C = x.shape
    H = int(round(math.sqrt(D)))
    W = H
    img = x.reshape(B, H, W, C)
    pad = jnp.pad(img, ((0, 0), (1, 1), (1, 1), (0, 0)))
    dw = jnp.zeros_like(img)
    for kh in range(3):
        for kw in range(3):
            dw = dw + pad[:, kh:kh + H, kw:kw + W, :] * wd[3 * kh + kw]
    dw = dw + bd
    y1 = dw.reshape(B, D, C) @ w1 + b1
    y1 = y1 * bns + bnb
    y2 = y1 @ w2 + b2
    y2 = 0.5 * y2 * (1.0 + jax.lax.erf(y2 * _INV_SQRT2))
    y3 = y2 @ w3 + b3
    return x + y3


def init_params(key, channels):
    """Deterministic synthetic parameters matching the PyTorch module's shapes.

    depth_conv : Conv2d(C, C, 3, padding=1, groups=C)  -> wd (9, C), bd (1, C)
    point_conv : Conv2d(C, 256, 1)                     -> w1 (C, 256), b1 (1, 256)
    BatchNorm2d(256) (eval, running stats)             -> bns/bnb (1, 256)
    Conv2d(256, 512, 1)                                -> w2 (256, 512), b2 (1, 512)
    Conv2d(512, C, 1)                                  -> w3 (512, C), b3 (1, C)
    """
    C = channels
    ks = jax.random.split(key, 12)
    wd = 0.2 * jax.random.normal(ks[0], (9, C), jnp.float32)
    bd = 0.1 * jax.random.normal(ks[1], (1, C), jnp.float32)
    w1 = 0.1 * jax.random.normal(ks[2], (C, 256), jnp.float32)
    b1 = 0.1 * jax.random.normal(ks[3], (1, 256), jnp.float32)
    gamma = 1.0 + 0.1 * jax.random.normal(ks[4], (1, 256), jnp.float32)
    beta = 0.1 * jax.random.normal(ks[5], (1, 256), jnp.float32)
    rmean = 0.1 * jax.random.normal(ks[6], (1, 256), jnp.float32)
    rvar = jax.random.uniform(ks[7], (1, 256), jnp.float32, minval=0.5, maxval=1.5)
    bns = gamma * jax.lax.rsqrt(rvar + 1e-5)
    bnb = beta - rmean * bns
    w2 = 0.05 * jax.random.normal(ks[8], (256, 512), jnp.float32)
    b2 = 0.05 * jax.random.normal(ks[9], (1, 512), jnp.float32)
    w3 = 0.05 * jax.random.normal(ks[10], (512, C), jnp.float32)
    b3 = 0.05 * jax.random.normal(ks[11], (1, C), jnp.float32)
    return (wd, bd, w1, b1, bns, bnb, w2, b2, w3, b3)


if __name__ == "__main__":
    key = jax.random.PRNGKey(0)
    kx, kp = jax.random.split(key)

    B, H, C = 2, 8, 4          # seq = H*H = 64 tokens, channels = 4
    D = H * H
    x = jax.random.normal(kx, (B, D, C), jnp.float32)
    params = init_params(kp, C)

    out = jax.block_until_ready(feedforward_forward(x, params))
    assert out.shape == (B, D, C) and out.dtype == jnp.float32
    assert bool(jnp.all(jnp.isfinite(out)))

    ref = _reference(x, params)
    max_err = float(jnp.max(jnp.abs(out - ref)))
    assert max_err < 5e-2, f"max abs error vs f32 reference: {max_err}"
    print("KERNEL_OK")
</pallas_src>

<mosaic_0001>
module attributes {stable_mosaic.version = 11 : i64} {
  func.func @_ff_kernel(%arg0: i32, %arg1: i32, %arg2: memref<1x1x10x10x128xf32, #tpu.memory_space<vmem>>, %arg3: memref<9x128xf32, #tpu.memory_space<vmem>>, %arg4: memref<128x256xbf16, #tpu.memory_space<vmem>>, %arg5: memref<1x256xf32, #tpu.memory_space<vmem>>, %arg6: memref<256x512xbf16, #tpu.memory_space<vmem>>, %arg7: memref<1x512xf32, #tpu.memory_space<vmem>>, %arg8: memref<512x128xbf16, #tpu.memory_space<vmem>>, %arg9: memref<1x128xf32, #tpu.memory_space<vmem>>, %arg10: memref<1x1x64x128xf32, #tpu.memory_space<vmem>>) attributes {dimension_semantics = [#tpu.dimension_semantics<parallel>, #tpu.dimension_semantics<parallel>], iteration_bounds = array<i64: 1, 2>, scalar_prefetch = 0 : i64, scratch_operands = 0 : i64, tpu.core_type = #tpu.core_type<tc>, window_params = [{transform_indices = @transform_0, window_bounds = array<i64: 1, 1, 10, 10, 128>}, {pipeline_mode = #tpu.pipeline_mode<synchronous>, transform_indices = @transform_1, window_bounds = array<i64: 9, 128>}, {pipeline_mode = #tpu.pipeline_mode<synchronous>, transform_indices = @transform_2, window_bounds = array<i64: 128, 256>}, {pipeline_mode = #tpu.pipeline_mode<synchronous>, transform_indices = @transform_3, window_bounds = array<i64: 1, 256>}, {pipeline_mode = #tpu.pipeline_mode<synchronous>, transform_indices = @transform_4, window_bounds = array<i64: 256, 512>}, {pipeline_mode = #tpu.pipeline_mode<synchronous>, transform_indices = @transform_5, window_bounds = array<i64: 1, 512>}, {pipeline_mode = #tpu.pipeline_mode<synchronous>, transform_indices = @transform_6, window_bounds = array<i64: 512, 128>}, {pipeline_mode = #tpu.pipeline_mode<synchronous>, transform_indices = @transform_7, window_bounds = array<i64: 1, 128>}, {transform_indices = @transform_8, window_bounds = array<i64: 1, 1, 64, 128>}]} {
    %c0 = arith.constant 0 : index
    %c0_0 = arith.constant 0 : index
    %c0_1 = arith.constant 0 : index
    %c0_2 = arith.constant 0 : index
    %c0_3 = arith.constant 0 : index
    %0 = vector.load %arg2[%c0, %c0_0, %c0_1, %c0_2, %c0_3] : memref<1x1x10x10x128xf32, #tpu.memory_space<vmem>>, vector<1x1x10x10x128xf32>
    %1 = vector.shape_cast %0 : vector<1x1x10x10x128xf32> to vector<10x10x128xf32>
    %c0_4 = arith.constant 0 : index
    %c0_5 = arith.constant 0 : index
    %2 = vector.load %arg3[%c0_4, %c0_5] : memref<9x128xf32, #tpu.memory_space<vmem>>, vector<9x128xf32>
    %3 = vector.extract_strided_slice %1 {offsets = [1, 1, 0], sizes = [8, 8, 128], strides = [1, 1, 1]} : vector<10x10x128xf32> to vector<8x8x128xf32>
    %4 = vector.extract_strided_slice %2 {offsets = [4, 0], sizes = [1, 128], strides = [1, 1]} : vector<9x128xf32> to vector<1x128xf32>
    %5 = vector.shape_cast %4 : vector<1x128xf32> to vector<128xf32>
    %6 = vector.shape_cast %5 : vector<128xf32> to vector<1x1x128xf32>
    %7 = vector.broadcast %6 : vector<1x1x128xf32> to vector<8x8x128xf32>
    %8 = arith.mulf %3, %7 : vector<8x8x128xf32>
    %9 = vector.extract_strided_slice %1 {offsets = [0, 0, 0], sizes = [8, 8, 128], strides = [1, 1, 1]} : vector<10x10x128xf32> to vector<8x8x128xf32>
    %10 = vector.extract_strided_slice %2 {offsets = [0, 0], sizes = [1, 128], strides = [1, 1]} : vector<9x128xf32> to vector<1x128xf32>
    %11 = vector.shape_cast %10 : vector<1x128xf32> to vector<128xf32>
    %12 = vector.shape_cast %11 : vector<128xf32> to vector<1x1x128xf32>
    %13 = vector.broadcast %12 : vector<1x1x128xf32> to vector<8x8x128xf32>
    %14 = arith.mulf %9, %13 : vector<8x8x128xf32>
    %15 = arith.addf %8, %14 : vector<8x8x128xf32>
    %16 = vector.extract_strided_slice %1 {offsets = [0, 1, 0], sizes = [8, 8, 128], strides = [1, 1, 1]} : vector<10x10x128xf32> to vector<8x8x128xf32>
    %17 = vector.extract_strided_slice %2 {offsets = [1, 0], sizes = [1, 128], strides = [1, 1]} : vector<9x128xf32> to vector<1x128xf32>
    %18 = vector.shape_cast %17 : vector<1x128xf32> to vector<128xf32>
    %19 = vector.shape_cast %18 : vector<128xf32> to vector<1x1x128xf32>
    %20 = vector.broadcast %19 : vector<1x1x128xf32> to vector<8x8x128xf32>
    %21 = arith.mulf %16, %20 : vector<8x8x128xf32>
    %22 = arith.addf %15, %21 : vector<8x8x128xf32>
    %23 = vector.extract_strided_slice %1 {offsets = [0, 2, 0], sizes = [8, 8, 128], strides = [1, 1, 1]} : vector<10x10x128xf32> to vector<8x8x128xf32>
    %24 = vector.extract_strided_slice %2 {offsets = [2, 0], sizes = [1, 128], strides = [1, 1]} : vector<9x128xf32> to vector<1x128xf32>
    %25 = vector.shape_cast %24 : vector<1x128xf32> to vector<128xf32>
    %26 = vector.shape_cast %25 : vector<128xf32> to vector<1x1x128xf32>
    %27 = vector.broadcast %26 : vector<1x1x128xf32> to vector<8x8x128xf32>
    %28 = arith.mulf %23, %27 : vector<8x8x128xf32>
    %29 = arith.addf %22, %28 : vector<8x8x128xf32>
    %30 = vector.extract_strided_slice %1 {offsets = [1, 0, 0], sizes = [8, 8, 128], strides = [1, 1, 1]} : vector<10x10x128xf32> to vector<8x8x128xf32>
    %31 = vector.extract_strided_slice %2 {offsets = [3, 0], sizes = [1, 128], strides = [1, 1]} : vector<9x128xf32> to vector<1x128xf32>
    %32 = vector.shape_cast %31 : vector<1x128xf32> to vector<128xf32>
    %33 = vector.shape_cast %32 : vector<128xf32> to vector<1x1x128xf32>
    %34 = vector.broadcast %33 : vector<1x1x128xf32> to vector<8x8x128xf32>
    %35 = arith.mulf %30, %34 : vector<8x8x128xf32>
    %36 = arith.addf %29, %35 : vector<8x8x128xf32>
    %37 = vector.extract_strided_slice %1 {offsets = [1, 2, 0], sizes = [8, 8, 128], strides = [1, 1, 1]} : vector<10x10x128xf32> to vector<8x8x128xf32>
    %38 = vector.extract_strided_slice %2 {offsets = [5, 0], sizes = [1, 128], strides = [1, 1]} : vector<9x128xf32> to vector<1x128xf32>
    %39 = vector.shape_cast %38 : vector<1x128xf32> to vector<128xf32>
    %40 = vector.shape_cast %39 : vector<128xf32> to vector<1x1x128xf32>
    %41 = vector.broadcast %40 : vector<1x1x128xf32> to vector<8x8x128xf32>
    %42 = arith.mulf %37, %41 : vector<8x8x128xf32>
    %43 = arith.addf %36, %42 : vector<8x8x128xf32>
    %44 = vector.extract_strided_slice %1 {offsets = [2, 0, 0], sizes = [8, 8, 128], strides = [1, 1, 1]} : vector<10x10x128xf32> to vector<8x8x128xf32>
    %45 = vector.extract_strided_slice %2 {offsets = [6, 0], sizes = [1, 128], strides = [1, 1]} : vector<9x128xf32> to vector<1x128xf32>
    %46 = vector.shape_cast %45 : vector<1x128xf32> to vector<128xf32>
    %47 = vector.shape_cast %46 : vector<128xf32> to vector<1x1x128xf32>
    %48 = vector.broadcast %47 : vector<1x1x128xf32> to vector<8x8x128xf32>
    %49 = arith.mulf %44, %48 : vector<8x8x128xf32>
    %50 = arith.addf %43, %49 : vector<8x8x128xf32>
    %51 = vector.extract_strided_slice %1 {offsets = [2, 1, 0], sizes = [8, 8, 128], strides = [1, 1, 1]} : vector<10x10x128xf32> to vector<8x8x128xf32>
    %52 = vector.extract_strided_slice %2 {offsets = [7, 0], sizes = [1, 128], strides = [1, 1]} : vector<9x128xf32> to vector<1x128xf32>
    %53 = vector.shape_cast %52 : vector<1x128xf32> to vector<128xf32>
    %54 = vector.shape_cast %53 : vector<128xf32> to vector<1x1x128xf32>
    %55 = vector.broadcast %54 : vector<1x1x128xf32> to vector<8x8x128xf32>
    %56 = arith.mulf %51, %55 : vector<8x8x128xf32>
    %57 = arith.addf %50, %56 : vector<8x8x128xf32>
    %58 = vector.extract_strided_slice %1 {offsets = [2, 2, 0], sizes = [8, 8, 128], strides = [1, 1, 1]} : vector<10x10x128xf32> to vector<8x8x128xf32>
    %59 = vector.extract_strided_slice %2 {offsets = [8, 0], sizes = [1, 128], strides = [1, 1]} : vector<9x128xf32> to vector<1x128xf32>
    %60 = vector.shape_cast %59 : vector<1x128xf32> to vector<128xf32>
    %61 = vector.shape_cast %60 : vector<128xf32> to vector<1x1x128xf32>
    %62 = vector.broadcast %61 : vector<1x1x128xf32> to vector<8x8x128xf32>
    %63 = arith.mulf %58, %62 : vector<8x8x128xf32>
    %64 = arith.addf %57, %63 : vector<8x8x128xf32>
    %65 = vector.shape_cast %64 : vector<8x8x128xf32> to vector<64x128xf32>
    %66 = arith.truncf %65 : vector<64x128xf32> to vector<64x128xbf16>
    %c0_6 = arith.constant 0 : index
    %c0_7 = arith.constant 0 : index
    %67 = vector.load %arg4[%c0_6, %c0_7] : memref<128x256xbf16, #tpu.memory_space<vmem>>, vector<128x256xbf16>
    %cst = arith.constant dense<0.000000e+00> : vector<64x256xf32>
    %68 = tpu.matmul %66, %67, %cst {dimension_numbers = #tpu.dot_dimension_numbers<[1], [0], [0], [1], [0, 0, 1, 1], [], []>} : vector<64x128xbf16>, vector<128x256xbf16>, vector<64x256xf32> -> vector<64x256xf32>
    %c0_8 = arith.constant 0 : index
    %c0_9 = arith.constant 0 : index
    %69 = vector.load %arg5[%c0_8, %c0_9] : memref<1x256xf32, #tpu.memory_space<vmem>>, vector<1x256xf32>
    %70 = vector.broadcast %69 : vector<1x256xf32> to vector<64x256xf32>
    %71 = arith.addf %68, %70 : vector<64x256xf32>
    %72 = arith.truncf %71 : vector<64x256xf32> to vector<64x256xbf16>
    %c0_10 = arith.constant 0 : index
    %c0_11 = arith.constant 0 : index
    %73 = vector.load %arg6[%c0_10, %c0_11] : memref<256x512xbf16, #tpu.memory_space<vmem>>, vector<256x512xbf16>
    %cst_12 = arith.constant dense<0.000000e+00> : vector<64x512xf32>
    %74 = tpu.matmul %72, %73, %cst_12 {dimension_numbers = #tpu.dot_dimension_numbers<[1], [0], [0], [1], [0, 0, 1, 1], [], []>} : vector<64x256xbf16>, vector<256x512xbf16>, vector<64x512xf32> -> vector<64x512xf32>
    %c0_13 = arith.constant 0 : index
    %c0_14 = arith.constant 0 : index
    %75 = vector.load %arg7[%c0_13, %c0_14] : memref<1x512xf32, #tpu.memory_space<vmem>>, vector<1x512xf32>
    %76 = vector.broadcast %75 : vector<1x512xf32> to vector<64x512xf32>
    %77 = arith.addf %74, %76 : vector<64x512xf32>
    %cst_15 = arith.constant 5.000000e-01 : f32
    %78 = vector.broadcast %cst_15 : f32 to vector<64x512xf32>
    %79 = arith.mulf %78, %77 : vector<64x512xf32>
    %cst_16 = arith.constant 0.707106769 : f32
    %80 = vector.broadcast %cst_16 : f32 to vector<64x512xf32>
    %81 = arith.mulf %77, %80 : vector<64x512xf32>
    %82 = math.erf %81 : vector<64x512xf32>
    %cst_17 = arith.constant 1.000000e+00 : f32
    %83 = vector.broadcast %cst_17 : f32 to vector<64x512xf32>
    %84 = arith.addf %83, %82 : vector<64x512xf32>
    %85 = arith.mulf %79, %84 : vector<64x512xf32>
    %86 = arith.truncf %85 : vector<64x512xf32> to vector<64x512xbf16>
    %c0_18 = arith.constant 0 : index
    %c0_19 = arith.constant 0 : index
    %87 = vector.load %arg8[%c0_18, %c0_19] : memref<512x128xbf16, #tpu.memory_space<vmem>>, vector<512x128xbf16>
    %cst_20 = arith.constant dense<0.000000e+00> : vector<64x128xf32>
    %88 = tpu.matmul %86, %87, %cst_20 {dimension_numbers = #tpu.dot_dimension_numbers<[1], [0], [0], [1], [0, 0, 1, 1], [], []>} : vector<64x512xbf16>, vector<512x128xbf16>, vector<64x128xf32> -> vector<64x128xf32>
    %c0_21 = arith.constant 0 : index
    %c0_22 = arith.constant 0 : index
    %89 = vector.load %arg9[%c0_21, %c0_22] : memref<1x128xf32, #tpu.memory_space<vmem>>, vector<1x128xf32>
    %90 = vector.broadcast %89 : vector<1x128xf32> to vector<64x128xf32>
    %91 = arith.addf %88, %90 : vector<64x128xf32>
    %92 = vector.shape_cast %3 : vector<8x8x128xf32> to vector<64x128xf32>
    %93 = arith.addf %92, %91 : vector<64x128xf32>
    %c0_23 = arith.constant 0 : index
    %c0_24 = arith.constant 0 : index
    %c0_25 = arith.constant 0 : index
    %c0_26 = arith.constant 0 : index
    %94 = vector.load %arg10[%c0_23, %c0_24, %c0_25, %c0_26] : memref<1x1x64x128xf32, #tpu.memory_space<vmem>>, vector<1x1x64x128xf32>
    %95 = vector.shape_cast %94 : vector<1x1x64x128xf32> to vector<64x128xf32>
    %96 = vector.shape_cast %93 : vector<64x128xf32> to vector<1x1x64x128xf32>
    tpu.vector_store %arg10[%c0_23, %c0_24, %c0_25, %c0_26], %96 {strides = array<i32>} : memref<1x1x64x128xf32, #tpu.memory_space<vmem>>, vector<1x1x64x128xf32>,
    return
  }
  func.func @transform_0(%arg0: i32, %arg1: i32) -> (i32, i32, i32, i32, i32) {
    %c0_i32 = arith.constant 0 : i32
    %c0_i32_0 = arith.constant 0 : i32
    %c0_i32_1 = arith.constant 0 : i32
    %c0_i32_2 = arith.constant 0 : i32
    return %arg1, %arg0, %c0_i32, %c0_i32_0, %c0_i32_1 : i32, i32, i32, i32, i32
  }
  func.func @transform_1(%arg0: i32, %arg1: i32) -> (i32, i32) {
    %c0_i32 = arith.constant 0 : i32
    %c0_i32_0 = arith.constant 0 : i32
    %c0_i32_1 = arith.constant 0 : i32
    return %c0_i32, %c0_i32_0 : i32, i32
  }
  func.func @transform_2(%arg0: i32, %arg1: i32) -> (i32, i32) {
    %c0_i32 = arith.constant 0 : i32
    %c0_i32_0 = arith.constant 0 : i32
    %c0_i32_1 = arith.constant 0 : i32
    return %c0_i32, %c0_i32_0 : i32, i32
  }
  func.func @transform_3(%arg0: i32, %arg1: i32) -> (i32, i32) {
    %c0_i32 = arith.constant 0 : i32
    %c0_i32_0 = arith.constant 0 : i32
    %c0_i32_1 = arith.constant 0 : i32
    return %c0_i32, %c0_i32_0 : i32, i32
  }
  func.func @transform_4(%arg0: i32, %arg1: i32) -> (i32, i32) {
    %c0_i32 = arith.constant 0 : i32
    %c0_i32_0 = arith.constant 0 : i32
    %c0_i32_1 = arith.constant 0 : i32
    return %c0_i32, %c0_i32_0 : i32, i32
  }
  func.func @transform_5(%arg0: i32, %arg1: i32) -> (i32, i32) {
    %c0_i32 = arith.constant 0 : i32
    %c0_i32_0 = arith.constant 0 : i32
    %c0_i32_1 = arith.constant 0 : i32
    return %c0_i32, %c0_i32_0 : i32, i32
  }
  func.func @transform_6(%arg0: i32, %arg1: i32) -> (i32, i32) {
    %c0_i32 = arith.constant 0 : i32
    %c0_i32_0 = arith.constant 0 : i32
    %c0_i32_1 = arith.constant 0 : i32
    return %c0_i32, %c0_i32_0 : i32, i32
  }
  func.func @transform_7(%arg0: i32, %arg1: i32) -> (i32, i32) {
    %c0_i32 = arith.constant 0 : i32
    %c0_i32_0 = arith.constant 0 : i32
    %c0_i32_1 = arith.constant 0 : i32
    return %c0_i32, %c0_i32_0 : i32, i32
  }
  func.func @transform_8(%arg0: i32, %arg1: i32) -> (i32, i32, i32, i32) {
    %c0_i32 = arith.constant 0 : i32
    %c0_i32_0 = arith.constant 0 : i32
    %c0_i32_1 = arith.constant 0 : i32
    return %arg1, %arg0, %c0_i32, %c0_i32_0 : i32, i32, i32, i32
  }
}

</mosaic_0001>

<llo_original>
// kernel: tpu_custom_call.1
$region0: #{tpu_custom_call.1}
  #allocation0 [shape = 'u32[]', space=smem, size = 0x4, offset = 0x4, fixed_abs, tag = 'smem constant byte address 0x4 - core index']
  #allocation1 [shape = 'u32[144,128]{1,0:T(1,128)}', space=vmem, size = 0x12000, scoped, tag = 'internal scratch']
  %s0 = inlined_call_operand.vmem [shape: f32[2,1,10,10,128], index: 0, kind: input, shape index: {}]
  %s1 = inlined_call_operand.hbm [shape: f32[9,128], index: 1, kind: input, shape index: {}]
  %s2 = inlined_call_operand.hbm [shape: bf16[128,256], index: 2, kind: input, shape index: {}]
  %s3 = inlined_call_operand.vmem [shape: f32[1,256], index: 3, kind: input, shape index: {}]
  %s4 = inlined_call_operand.vmem [shape: bf16[256,512], index: 4, kind: input, shape index: {}]
  %s5 = inlined_call_operand.vmem [shape: f32[1,512], index: 5, kind: input, shape index: {}]
  %s6 = inlined_call_operand.hbm [shape: bf16[512,128], index: 6, kind: input, shape index: {}]
  %s7 = inlined_call_operand.vmem [shape: f32[1,128], index: 7, kind: input, shape index: {}]
  %s8 = inlined_call_operand.hbm [shape: f32[2,1,64,128], index: 8, kind: output, shape index: {}]
  %s9 = sld [smem:[#allocation0]]
  $region77: #{tpu_custom_call.1} parent=0
    _
  %s11 = ssub.s32 1, %s9
  %s12 = scalar_select 0, %s11, %s9
  $region1: #{tpu_custom_call.1} parent=0
    #allocation2 [shape = 'u8[8192]{0}', space=vmem, size = 0x2000, scoped, tag = 'input window, operand 1, single buffered']
    #allocation3 [shape = 's32[2]{0}', space=sflag, size = 0x8, scoped, tag = 'scoped memory for tpu_custom_call.1']
    #allocation4 [shape = 's32[2]{0}', space=sflag, size = 0x8, scoped, tag = 'scoped memory for tpu_custom_call.1']
    #allocation5 [shape = 'u8[65536]{0}', space=vmem, size = 0x10000, scoped, tag = 'input window, operand 2, single buffered']
    #allocation6 [shape = 's32[1]{0}', space=sflag, size = 0x4, scoped, tag = 'scoped memory for tpu_custom_call.1']
    #allocation7 [shape = 'u8[131072]{0}', space=vmem, size = 0x20000, scoped, tag = 'input window, operand 6, single buffered']
    #allocation8 [shape = 'u8[65536]{0}', space=vmem, size = 0x10000, scoped, tag = 'output window, operand 0']
    %13 = vsyncpa [#allocation3], 0
    %14 = vsyncpa [#allocation6], 0
    %15 = vsyncpa [#allocation4], 0
    %s16 = scalar_lea.sflag [#allocation4], 1
    %17 = vsyncpa %s16, 0
    loop: start=0, step=1, limit=4
    $region2: #{tpu_custom_call.1} parent=1 // loop_pre_header
      _
    $region3: #{tpu_custom_call.1} parent=1 // loop_header
      %s19 = sphi 0, %s23
      %p20 = scmp.ge.s32.totalorder %s19, 4
      %s26 = sphi 0, %s38
      %s27 = sphi 0, %s34
      %s28 = sphi 0, %s26
      %s29 = sphi 0, %s27
      %s30 = sphi 0, %s28
      %s31 = sphi 0, %s29
      %s43 = sphi 0, %s45
      %s46 = sphi 0, %s43
      %s47 = sphi 0, %s46
      %s63 = sphi 0, %s47
      %s67 = sphi 0, %s67
      %s69 = sphi 0, %s67
      %s70 = sphi 0, %s69
      %s84 = sphi 0, %s70
      %s88 = sphi 0, %s88
      %s90 = sphi 0, %s88
      %s91 = sphi 0, %s90
      %s105 = sphi 0, %s91
      %s109 = sphi 0, %s109
      %s111 = sphi 0, %s109
      %s112 = sphi 0, %s111
      %s126 = sphi 0, %s112
      %s130 = sphi 0, %s130
      %s132 = sphi 0, %s130
      %s133 = sphi 0, %s132
      %s147 = sphi 0, %s133
      %s151 = sphi 0, %s151
      %s153 = sphi 0, %s151
      %s154 = sphi 0, %s153
      %s168 = sphi 0, %s154
      %s172 = sphi 0, %s172
      %s174 = sphi 0, %s172
      %s175 = sphi 0, %s174
      %s189 = sphi 0, %s175
      %s193 = sphi 0, %s193
      %s195 = sphi 0, %s193
      %s196 = sphi 0, %s195
      %s210 = sphi 0, %s196
      %s218 = sphi 0, %s220
      %s221 = sphi 0, %s218
      %s222 = sphi 0, %s221
      %s238 = sphi 0, %s222
    $region4: #{tpu_custom_call.1} parent=1 // loop_header_branch
      %22 = sbr.rel (%p20) target = $region8
    $region5: #{tpu_custom_call.1} parent=1 // loop_body
      %s24 = ssub.s32 %s19, 1
      %s25 = ssub.s32 %s19, 2
      %s32 = sadd.s32 1, %s27
      %p33 = scmp.ge.s32.totalorder %s32, 2
      %s34 = scalar_select %p33, 0, %s32
      %s35 = sadd.s32 1, %s26
      %s36 = scalar_select %p33, %s35, %s26
      %p37 = scmp.ge.s32.totalorder %s36, 1
      %s38 = scalar_select %p37, 0, %s36
      %s39 = ssub.s32 %s27, %s34
      %s40 = ssub.s32 %s26, %s38
      %s41 = sor.u32 %s39, %s40
      %p42 = scmp.eq.s32.totalorder %s41, 0
      %s44 = sadd.s32 %s43, 1
      %s45 = scalar_select %p42, %s43, %s44
      %p48 = pneg %p42
      %p49 = scmp.eq.s32.totalorder %s19, 1
      %p50 = por %p48, %p49
      %p51 = scmp.ne.s32.totalorder %s43, %s46
      %p52 = scmp.eq.s32.totalorder %s19, 0
      %p53 = por %p51, %p52
      %p54 = scmp.ne.s32.totalorder %s43, %s46
      %p55 = scmp.eq.s32.totalorder %s24, 1
      %p56 = por %p54, %p55
      %p57 = scmp.ne.s32.totalorder %s46, %s47
      %p58 = scmp.eq.s32.totalorder %s24, 0
      %p59 = por %p57, %p58
      %p60 = scmp.ne.s32.totalorder %s46, %s47
      %p61 = scmp.eq.s32.totalorder %s25, 1
      %p62 = por %p60, %p61
      %p64 = scmp.ne.s32.totalorder %s47, %s63
      %p65 = scmp.eq.s32.totalorder %s25, 0
      %p66 = por %p64, %p65
      %s68 = sadd.s32 %s67, 1
      %p71 = scmp.eq.s32.totalorder %s19, 1
      %p72 = scmp.ne.s32.totalorder %s67, %s69
      %p73 = scmp.eq.s32.totalorder %s19, 0
      %p74 = por %p72, %p73
      %p75 = scmp.ne.s32.totalorder %s67, %s69
      %p76 = scmp.eq.s32.totalorder %s24, 1
      %p77 = por %p75, %p76
      %p78 = scmp.ne.s32.totalorder %s69, %s70
      %p79 = scmp.eq.s32.totalorder %s24, 0
      %p80 = por %p78, %p79
      %p81 = scmp.ne.s32.totalorder %s69, %s70
      %p82 = scmp.eq.s32.totalorder %s25, 1
      %p83 = por %p81, %p82
      %p85 = scmp.ne.s32.totalorder %s70, %s84
      %p86 = scmp.eq.s32.totalorder %s25, 0
      %p87 = por %p85, %p86
      %s89 = sadd.s32 %s88, 1
      %p92 = scmp.eq.s32.totalorder %s19, 1
      %p93 = scmp.ne.s32.totalorder %s88, %s90
      %p94 = scmp.eq.s32.totalorder %s19, 0
      %p95 = por %p93, %p94
      %p96 = scmp.ne.s32.totalorder %s88, %s90
      %p97 = scmp.eq.s32.totalorder %s24, 1
      %p98 = por %p96, %p97
      %p99 = scmp.ne.s32.totalorder %s90, %s91
      %p100 = scmp.eq.s32.totalorder %s24, 0
      %p101 = por %p99, %p100
      %p102 = scmp.ne.s32.totalorder %s90, %s91
      %p103 = scmp.eq.s32.totalorder %s25, 1
      %p104 = por %p102, %p103
      %p106 = scmp.ne.s32.totalorder %s91, %s105
      %p107 = scmp.eq.s32.totalorder %s25, 0
      %p108 = por %p106, %p107
      %s110 = sadd.s32 %s109, 1
      %p113 = scmp.eq.s32.totalorder %s19, 1
      %p114 = scmp.ne.s32.totalorder %s109, %s111
      %p115 = scmp.eq.s32.totalorder %s19, 0
      %p116 = por %p114, %p115
      %p117 = scmp.ne.s32.totalorder %s109, %s111
      %p118 = scmp.eq.s32.totalorder %s24, 1
      %p119 = por %p117, %p118
      %p120 = scmp.ne.s32.totalorder %s111, %s112
      %p121 = scmp.eq.s32.totalorder %s24, 0
      %p122 = por %p120, %p121
      %p123 = scmp.ne.s32.totalorder %s111, %s112
      %p124 = scmp.eq.s32.totalorder %s25, 1
      %p125 = por %p123, %p124
      %p127 = scmp.ne.s32.totalorder %s112, %s126
      %p128 = scmp.eq.s32.totalorder %s25, 0
      %p129 = por %p127, %p128
      %s131 = sadd.s32 %s130, 1
      %p134 = scmp.eq.s32.totalorder %s19, 1
      %p135 = scmp.ne.s32.totalorder %s130, %s132
      %p136 = scmp.eq.s32.totalorder %s19, 0
      %p137 = por %p135, %p136
      %p138 = scmp.ne.s32.totalorder %s130, %s132
      %p139 = scmp.eq.s32.totalorder %s24, 1
      %p140 = por %p138, %p139
      %p141 = scmp.ne.s32.totalorder %s132, %s133
      %p142 = scmp.eq.s32.totalorder %s24, 0
      %p143 = por %p141, %p142
      %p144 = scmp.ne.s32.totalorder %s132, %s133
      %p145 = scmp.eq.s32.totalorder %s25, 1
      %p146 = por %p144, %p145
      %p148 = scmp.ne.s32.totalorder %s133, %s147
      %p149 = scmp.eq.s32.totalorder %s25, 0
      %p150 = por %p148, %p149
      %s152 = sadd.s32 %s151, 1
      %p155 = scmp.eq.s32.totalorder %s19, 1
      %p156 = scmp.ne.s32.totalorder %s151, %s153
      %p157 = scmp.eq.s32.totalorder %s19, 0
      %p158 = por %p156, %p157
      %p159 = scmp.ne.s32.totalorder %s151, %s153
      %p160 = scmp.eq.s32.totalorder %s24, 1
      %p161 = por %p159, %p160
      %p162 = scmp.ne.s32.totalorder %s153, %s154
      %p163 = scmp.eq.s32.totalorder %s24, 0
      %p164 = por %p162, %p163
      %p165 = scmp.ne.s32.totalorder %s153, %s154
      %p166 = scmp.eq.s32.totalorder %s25, 1
      %p167 = por %p165, %p166
      %p169 = scmp.ne.s32.totalorder %s154, %s168
      %p170 = scmp.eq.s32.totalorder %s25, 0
      %p171 = por %p169, %p170
      %s173 = sadd.s32 %s172, 1
      %p176 = scmp.eq.s32.totalorder %s19, 1
      %p177 = scmp.ne.s32.totalorder %s172, %s174
      %p178 = scmp.eq.s32.totalorder %s19, 0
      %p179 = por %p177, %p178
      %p180 = scmp.ne.s32.totalorder %s172, %s174
      %p181 = scmp.eq.s32.totalorder %s24, 1
      %p182 = por %p180, %p181
      %p183 = scmp.ne.s32.totalorder %s174, %s175
      %p184 = scmp.eq.s32.totalorder %s24, 0
      %p185 = por %p183, %p184
      %p186 = scmp.ne.s32.totalorder %s174, %s175
      %p187 = scmp.eq.s32.totalorder %s25, 1
      %p188 = por %p186, %p187
      %p190 = scmp.ne.s32.totalorder %s175, %s189
      %p191 = scmp.eq.s32.totalorder %s25, 0
      %p192 = por %p190, %p191
      %s194 = sadd.s32 %s193, 1
      %p197 = scmp.eq.s32.totalorder %s19, 1
      %p198 = scmp.ne.s32.totalorder %s193, %s195
      %p199 = scmp.eq.s32.totalorder %s19, 0
      %p200 = por %p198, %p199
      %p201 = scmp.ne.s32.totalorder %s193, %s195
      %p202 = scmp.eq.s32.totalorder %s24, 1
      %p203 = por %p201, %p202
      %p204 = scmp.ne.s32.totalorder %s195, %s196
      %p205 = scmp.eq.s32.totalorder %s24, 0
      %p206 = por %p204, %p205
      %p207 = scmp.ne.s32.totalorder %s195, %s196
      %p208 = scmp.eq.s32.totalorder %s25, 1
      %p209 = por %p207, %p208
      %p211 = scmp.ne.s32.totalorder %s196, %s210
      %p212 = scmp.eq.s32.totalorder %s25, 0
      %p213 = por %p211, %p212
      %s214 = ssub.s32 %s27, %s34
      %s215 = ssub.s32 %s26, %s38
      %s216 = sor.u32 %s214, %s215
      %p217 = scmp.eq.s32.totalorder %s216, 0
      %s219 = sadd.s32 %s218, 1
      %s220 = scalar_select %p217, %s218, %s219
      %p223 = pneg %p217
      %p224 = scmp.eq.s32.totalorder %s19, 1
      %p225 = por %p223, %p224
      %p226 = scmp.ne.s32.totalorder %s218, %s221
      %p227 = scmp.eq.s32.totalorder %s19, 0
      %p228 = por %p226, %p227
      %p229 = scmp.ne.s32.totalorder %s218, %s221
      %p230 = scmp.eq.s32.totalorder %s24, 1
      %p231 = por %p229, %p230
      %p232 = scmp.ne.s32.totalorder %s221, %s222
      %p233 = scmp.eq.s32.totalorder %s24, 0
      %p234 = por %p232, %p233
      %p235 = scmp.ne.s32.totalorder %s221, %s222
      %p236 = scmp.eq.s32.totalorder %s25, 1
      %p237 = por %p235, %p236
      %p239 = scmp.ne.s32.totalorder %s222, %s238
      %p240 = scmp.eq.s32.totalorder %s25, 0
      %p241 = por %p239, %p240
      %p242 = scmp.le.s32.totalorder 1, %s19
      %p243 = scmp.lt.s32.totalorder %s19, 3
      %p244 = pnand %p242, %p243
      %p245 = pneg %p244
      // Predicated region
      $region9: #{tpu_custom_call.1} parent=5 // pred_check
        _
      $region10: #{tpu_custom_call.1} parent=5 // pred_check_branch
        %247 = sbr.rel (%p244) target = $region12
      $region11: #{tpu_custom_call.1} parent=5 // pred_region
        %s248 = ssub.s32 %s19, 1
        // Predicated region
        $region13: #{tpu_custom_call.1} parent=11 // pred_check
          %p249 = pneg %p80
        $region14: #{tpu_custom_call.1} parent=11 // pred_check_branch
          %251 = sbr.rel (%p249) target = $region16
        $region15: #{tpu_custom_call.1} parent=11 // pred_region
          %s253 = ssub.s32 256, 256
          %254 = vsyncadd [#allocation3], %s253
          %s255 = sshll.u32 [#allocation2], 4
          %s256 = int_to_ptr.vmem [resolvable:$true] %s255
          %261 = dma.hbm_to_vmem [thread:$0]  %s1, 256, %s256, [#allocation3], 128, 128, 8
        $region16: #{tpu_custom_call.1} parent=11 // pred_fallthru
          _
        // Predicated region
        $region17: #{tpu_custom_call.1} parent=11 // pred_check
          %p262 = pneg %p101
        $region18: #{tpu_custom_call.1} parent=11 // pred_check_branch
          %264 = sbr.rel (%p262) target = $region20
        $region19: #{tpu_custom_call.1} parent=11 // pred_region
          %s266 = ssub.s32 2048, 2048
          %267 = vsyncadd [#allocation6], %s266
          %s268 = sshll.u32 [#allocation5], 4
          %s269 = int_to_ptr.vmem [resolvable:$true] %s268
          %274 = dma.hbm_to_vmem [thread:$0]  %s2, 2048, %s269, [#allocation6], 128, 128, 8
        $region20: #{tpu_custom_call.1} parent=11 // pred_fallthru
          _
        // Predicated region
        $region21: #{tpu_custom_call.1} parent=11 // pred_check
          %p275 = pneg %p122
        $region22: #{tpu_custom_call.1} parent=11 // pred_check_branch
          %277 = sbr.rel (%p275) target = $region24
        $region23: #{tpu_custom_call.1} parent=11 // pred_region
          _
        $region24: #{tpu_custom_call.1} parent=11 // pred_fallthru
          _
        // Predicated region
        $region25: #{tpu_custom_call.1} parent=11 // pred_check
          %p278 = pneg %p143
        $region26: #{tpu_custom_call.1} parent=11 // pred_check_branch
          %280 = sbr.rel (%p278) target = $region28
        $region27: #{tpu_custom_call.1} parent=11 // pred_region
          _
        $region28: #{tpu_custom_call.1} parent=11 // pred_fallthru
          _
        // Predicated region
        $region29: #{tpu_custom_call.1} parent=11 // pred_check
          %p281 = pneg %p164
        $region30: #{tpu_custom_call.1} parent=11 // pred_check_branch
          %283 = sbr.rel (%p281) target = $region32
        $region31: #{tpu_custom_call.1} parent=11 // pred_region
          _
        $region32: #{tpu_custom_call.1} parent=11 // pred_fallthru
          _
        // Predicated region
        $region33: #{tpu_custom_call.1} parent=11 // pred_check
          %p284 = pneg %p185
        $region34: #{tpu_custom_call.1} parent=11 // pred_check_branch
          %286 = sbr.rel (%p284) target = $region36
        $region35: #{tpu_custom_call.1} parent=11 // pred_region
          %s288 = ssub.s32 4096, 4096
          %289 = vsyncadd [#allocation6], %s288
          %s290 = sshll.u32 [#allocation7], 4
          %s291 = int_to_ptr.vmem [resolvable:$true] %s290
          %296 = dma.hbm_to_vmem [thread:$0]  %s6, 4096, %s291, [#allocation6], 64, 64, 4
        $region36: #{tpu_custom_call.1} parent=11 // pred_fallthru
          _
        // Predicated region
        $region37: #{tpu_custom_call.1} parent=11 // pred_check
          %p297 = pneg %p206
        $region38: #{tpu_custom_call.1} parent=11 // pred_check_branch
          %299 = sbr.rel (%p297) target = $region40
        $region39: #{tpu_custom_call.1} parent=11 // pred_region
          _
        $region40: #{tpu_custom_call.1} parent=11 // pred_fallthru
          _
      $region12: #{tpu_custom_call.1} parent=5 // pred_fallthru
        _
      %p300 = scmp.lt.s32.totalorder %s19, 2
      // Predicated region
      $region41: #{tpu_custom_call.1} parent=5 // pred_check
        %p301 = pneg %p300
      $region42: #{tpu_custom_call.1} parent=5 // pred_check_branch
        %303 = sbr.rel (%p301) target = $region44
      $region43: #{tpu_custom_call.1} parent=5 // pred_region
        // Predicated region
        $region45: #{tpu_custom_call.1} parent=43 // pred_check
          %p304 = pneg %p53
        $region46: #{tpu_custom_call.1} parent=43 // pred_check_branch
          %306 = sbr.rel (%p304) target = $region48
        $region47: #{tpu_custom_call.1} parent=43 // pred_region
          %p307 = scmp.lt.s32.totalorder %s27, 1
          %s308 = scalar_select %p307, %s27, 1
          %p309 = scmp.lt.s32.totalorder %s26, 0
          %s310 = scalar_select %p309, %s26, 0
          %s311 = smul.addr %s310, 20
          %s312 = smul.addr %s308, 20
          %s313 = sadd.s32 %s311, %s312
          %s314 = smul.addr %s313, 8
          %s315 = scalar_lea.vmem %s0, %s314
        $region48: #{tpu_custom_call.1} parent=43 // pred_fallthru
          _
      $region44: #{tpu_custom_call.1} parent=5 // pred_fallthru
        _
      %p316 = scmp.le.s32.totalorder 1, %s19
      %p317 = scmp.lt.s32.totalorder %s19, 3
      %p318 = pnand %p316, %p317
      %p319 = pneg %p318
      // Predicated region
      $region49: #{tpu_custom_call.1} parent=5 // pred_check
        _
      $region50: #{tpu_custom_call.1} parent=5 // pred_check_branch
        %321 = sbr.rel (%p318) target = $region52
      $region51: #{tpu_custom_call.1} parent=5 // pred_region
        %s322 = ssub.s32 %s19, 1
        // Predicated region
        $region53: #{tpu_custom_call.1} parent=51 // pred_check
          %p323 = pneg %p80
        $region54: #{tpu_custom_call.1} parent=51 // pred_check_branch
          %325 = sbr.rel (%p323) target = $region56
        $region55: #{tpu_custom_call.1} parent=51 // pred_region
          %326 = dma.done [#allocation3], 256
        $region56: #{tpu_custom_call.1} parent=51 // pred_fallthru
          _
        // Predicated region
        $region57: #{tpu_custom_call.1} parent=51 // pred_check
          %p327 = pneg %p101
        $region58: #{tpu_custom_call.1} parent=51 // pred_check_branch
          %329 = sbr.rel (%p327) target = $region60
        $region59: #{tpu_custom_call.1} parent=51 // pred_region
          %330 = dma.done [#allocation6], 2048
        $region60: #{tpu_custom_call.1} parent=51 // pred_fallthru
          _
        // Predicated region
        $region61: #{tpu_custom_call.1} parent=51 // pred_check
          %p331 = pneg %p185
        $region62: #{tpu_custom_call.1} parent=51 // pred_check_branch
          %333 = sbr.rel (%p331) target = $region64
        $region63: #{tpu_custom_call.1} parent=51 // pred_region
          %334 = dma.done [#allocation6], 4096
        $region64: #{tpu_custom_call.1} parent=51 // pred_fallthru
          _
        %p335 = scmp.lt.s32.totalorder %s29, 1
        %s336 = scalar_select %p335, %s29, 1
        %p337 = scmp.lt.s32.totalorder %s28, 0
        %s338 = scalar_select %p337, %s28, 0
        %s339 = smul.addr %s338, 20
        %s340 = smul.addr %s336, 20
        %s341 = sadd.s32 %s339, %s340
        %s342 = smul.addr %s341, 8
        %s343 = scalar_lea.vmem %s0, %s342
        %p344 = pneg %p59
        %p345 = pneg %p56
        %p346 = pneg %p80
        %p347 = pneg %p77
        %p348 = pneg %p101
        %p349 = pneg %p98
        %p350 = pneg %p122
        %p351 = pneg %p119
        %p352 = pneg %p143
        %p353 = pneg %p140
        %p354 = pneg %p164
        %p355 = pneg %p161
        %p356 = pneg %p185
        %p357 = pneg %p182
        %p358 = pneg %p206
        %p359 = pneg %p203
        %p360 = pneg %p234
        %p361 = pneg %p231
        %s362 = sand.u32 %s221, 1
        %s363 = scalar_lea.sflag [#allocation4], %s362
        %s364 = sand.u32 %s221, 1
        %s365 = smul.addr %s364, 64
        %s366 = scalar_lea.vmem [#allocation8], %s365
        %p367 = scmp.lt.s32.totalorder %s29, 1
        %s368 = scalar_select %p367, %s29, 1
        %p369 = scmp.lt.s32.totalorder %s28, 0
        %s370 = scalar_select %p369, %s28, 0
        %s371 = smul.addr %s370, 20
        %s372 = smul.addr %s368, 20
        %s373 = sadd.s32 %s371, %s372
        %s374 = smul.addr %s373, 8
        %s375 = scalar_lea.vmem %s0, %s374
        %v377 = vld [vmem:[%s375] sm:$0xff]
        %v378 = vld [vmem:[%s375 + $0x8] sm:$0x3]
        %v379 = vld [vmem:[%s375 + $0x10] sm:$0xff]
        %v380 = vld [vmem:[%s375 + $0x18] sm:$0x3]
        %v381 = vld [vmem:[%s375 + $0x20] sm:$0xff]
        %v382 = vld [vmem:[%s375 + $0x28] sm:$0x3]
        %v383 = vld [vmem:[%s375 + $0x30] sm:$0xff]
        %v384 = vld [vmem:[%s375 + $0x38] sm:$0x3]
        %v385 = vld [vmem:[%s375 + $0x40] sm:$0xff]
        %v386 = vld [vmem:[%s375 + $0x48] sm:$0x3]
        %v387 = vld [vmem:[%s375 + $0x50] sm:$0xff]
        %v388 = vld [vmem:[%s375 + $0x58] sm:$0x3]
        %v389 = vld [vmem:[%s375 + $0x60] sm:$0xff]
        %v390 = vld [vmem:[%s375 + $0x68] sm:$0x3]
        %v391 = vld [vmem:[%s375 + $0x70] sm:$0xff]
        %v392 = vld [vmem:[%s375 + $0x78] sm:$0x3]
        %v393 = vld [vmem:[%s375 + $0x80] sm:$0xff]
        %v394 = vld [vmem:[%s375 + $0x88] sm:$0x3]
        %v395 = vld [vmem:[%s375 + $0x90] sm:$0xff]
        %v396 = vld [vmem:[%s375 + $0x98] sm:$0x3]
        %v397 = vld [vmem:[#allocation2] sm:$0xff]
        %v398 = vld [vmem:[#allocation2 + $0x8] sm:$0x1]
        %v399 = vlaneseq
        %v400 = vshrl.u32 %v399, 7
        %v401 = vsub.s32 4, %v400
        %v402 = vrot.slane %v397, %v401
        %v403 = vmul.f32 %v379, %v402
        %v404 = vmul.f32 %v380, %v402
        %v405 = vmul.f32 %v381, %v402
        %v406 = vmul.f32 %v382, %v402
        %v407 = vmul.f32 %v383, %v402
        %v408 = vmul.f32 %v384, %v402
        %v409 = vmul.f32 %v385, %v402
        %v410 = vmul.f32 %v386, %v402
        %v411 = vmul.f32 %v387, %v402
        %v412 = vmul.f32 %v388, %v402
        %v413 = vmul.f32 %v389, %v402
        %v414 = vmul.f32 %v390, %v402
        %v415 = vmul.f32 %v391, %v402
        %v416 = vmul.f32 %v392, %v402
        %v417 = vmul.f32 %v393, %v402
        %v418 = vmul.f32 %v394, %v402
        %v419 = vlaneseq
        %v420 = vshrl.u32 %v419, 7
        %v421 = vsub.s32 0, %v420
        %v422 = vrot.slane %v397, %v421
        %v423 = vmul.f32 %v377, %v422
        %v424 = vmul.f32 %v379, %v422
        %v425 = vmul.f32 %v381, %v422
        %v426 = vmul.f32 %v383, %v422
        %v427 = vmul.f32 %v385, %v422
        %v428 = vmul.f32 %v387, %v422
        %v429 = vmul.f32 %v389, %v422
        %v430 = vmul.f32 %v391, %v422
        %v439 = vrot.slane %v423, 7
        %v440 = vrot.slane %v424, 7
        %v441 = vrot.slane %v425, 7
        %v442 = vrot.slane %v426, 7
        %v443 = vrot.slane %v427, 7
        %v444 = vrot.slane %v428, 7
        %v445 = vrot.slane %v429, 7
        %v446 = vrot.slane %v430, 7
        %v455 = vadd.f32 %v403, %v439
        %v456 = vadd.f32 %v404, %v439
        %v457 = vadd.f32 %v405, %v440
        %v458 = vadd.f32 %v406, %v440
        %v459 = vadd.f32 %v407, %v441
        %v460 = vadd.f32 %v408, %v441
        %v461 = vadd.f32 %v409, %v442
        %v462 = vadd.f32 %v410, %v442
        %v463 = vadd.f32 %v411, %v443
        %v464 = vadd.f32 %v412, %v443
        %v465 = vadd.f32 %v413, %v444
        %v466 = vadd.f32 %v414, %v444
        %v467 = vadd.f32 %v415, %v445
        %v468 = vadd.f32 %v416, %v445
        %v469 = vadd.f32 %v417, %v446
        %v470 = vadd.f32 %v418, %v446
        %v471 = vlaneseq
        %v472 = vshrl.u32 %v471, 7
        %v473 = vsub.s32 1, %v472
        %v474 = vrot.slane %v397, %v473
        %v475 = vmul.f32 %v377, %v474
        %v476 = vmul.f32 %v378, %v474
        %v477 = vmul.f32 %v379, %v474
        %v478 = vmul.f32 %v380, %v474
        %v479 = vmul.f32 %v381, %v474
        %v480 = vmul.f32 %v382, %v474
        %v481 = vmul.f32 %v383, %v474
        %v482 = vmul.f32 %v384, %v474
        %v483 = vmul.f32 %v385, %v474
        %v484 = vmul.f32 %v386, %v474
        %v485 = vmul.f32 %v387, %v474
        %v486 = vmul.f32 %v388, %v474
        %v487 = vmul.f32 %v389, %v474
        %v488 = vmul.f32 %v390, %v474
        %v489 = vmul.f32 %v391, %v474
        %v490 = vmul.f32 %v392, %v474
        %v491 = vadd.f32 %v455, %v475
        %v492 = vadd.f32 %v456, %v476
        %v493 = vadd.f32 %v457, %v477
        %v494 = vadd.f32 %v458, %v478
        %v495 = vadd.f32 %v459, %v479
        %v496 = vadd.f32 %v460, %v480
        %v497 = vadd.f32 %v461, %v481
        %v498 = vadd.f32 %v462, %v482
        %v499 = vadd.f32 %v463, %v483
        %v500 = vadd.f32 %v464, %v484
        %v501 = vadd.f32 %v465, %v485
        %v502 = vadd.f32 %v466, %v486
        %v503 = vadd.f32 %v467, %v487
        %v504 = vadd.f32 %v468, %v488
        %v505 = vadd.f32 %v469, %v489
        %v506 = vadd.f32 %v470, %v490
        %v507 = vlaneseq
        %v508 = vshrl.u32 %v507, 7
        %v509 = vsub.s32 2, %v508
        %v510 = vrot.slane %v397, %v509
        %v511 = vmul.f32 %v377, %v510
        %v512 = vmul.f32 %v378, %v510
        %v513 = vmul.f32 %v379, %v510
        %v514 = vmul.f32 %v380, %v510
        %v515 = vmul.f32 %v381, %v510
        %v516 = vmul.f32 %v382, %v510
        %v517 = vmul.f32 %v383, %v510
        %v518 = vmul.f32 %v384, %v510
        %v519 = vmul.f32 %v385, %v510
        %v520 = vmul.f32 %v386, %v510
        %v521 = vmul.f32 %v387, %v510
        %v522 = vmul.f32 %v388, %v510
        %v523 = vmul.f32 %v389, %v510
        %v524 = vmul.f32 %v390, %v510
        %v525 = vmul.f32 %v391, %v510
        %v526 = vmul.f32 %v392, %v510
        %vm543 = vcmask 1046528
        %v544 = vrot.slane %v511, 1
        %v545 = vrot.slane %v512, 1
        %v546 = vsel %vm543, %v544, %v545
        %v547 = vrot.slane %v513, 1
        %v548 = vrot.slane %v514, 1
        %v549 = vsel %vm543, %v547, %v548
        %v550 = vrot.slane %v515, 1
        %v551 = vrot.slane %v516, 1
        %v552 = vsel %vm543, %v550, %v551
        %v553 = vrot.slane %v517, 1
        %v554 = vrot.slane %v518, 1
        %v555 = vsel %vm543, %v553, %v554
        %v556 = vrot.slane %v519, 1
        %v557 = vrot.slane %v520, 1
        %v558 = vsel %vm543, %v556, %v557
        %v559 = vrot.slane %v521, 1
        %v560 = vrot.slane %v522, 1
        %v561 = vsel %vm543, %v559, %v560
        %v562 = vrot.slane %v523, 1
        %v563 = vrot.slane %v524, 1
        %v564 = vsel %vm543, %v562, %v563
        %v565 = vrot.slane %v525, 1
        %v566 = vrot.slane %v526, 1
        %v567 = vsel %vm543, %v565, %v566
        %v584 = vadd.f32 %v491, %v546
        %v585 = vadd.f32 %v492, %v545
        %v586 = vadd.f32 %v493, %v549
        %v587 = vadd.f32 %v494, %v548
        %v588 = vadd.f32 %v495, %v552
        %v589 = vadd.f32 %v496, %v551
        %v590 = vadd.f32 %v497, %v555
        %v591 = vadd.f32 %v498, %v554
        %v592 = vadd.f32 %v499, %v558
        %v593 = vadd.f32 %v500, %v557
        %v594 = vadd.f32 %v501, %v561
        %v595 = vadd.f32 %v502, %v560
        %v596 = vadd.f32 %v503, %v564
        %v597 = vadd.f32 %v504, %v563
        %v598 = vadd.f32 %v505, %v567
        %v599 = vadd.f32 %v506, %v566
        %v600 = vlaneseq
        %v601 = vshrl.u32 %v600, 7
        %v602 = vsub.s32 3, %v601
        %v603 = vrot.slane %v397, %v602
        %v604 = vmul.f32 %v379, %v603
        %v605 = vmul.f32 %v381, %v603
        %v606 = vmul.f32 %v383, %v603
        %v607 = vmul.f32 %v385, %v603
        %v608 = vmul.f32 %v387, %v603
        %v609 = vmul.f32 %v389, %v603
        %v610 = vmul.f32 %v391, %v603
        %v611 = vmul.f32 %v393, %v603
        %v620 = vrot.slane %v604, 7
        %v621 = vrot.slane %v605, 7
        %v622 = vrot.slane %v606, 7
        %v623 = vrot.slane %v607, 7
        %v624 = vrot.slane %v608, 7
        %v625 = vrot.slane %v609, 7
        %v626 = vrot.slane %v610, 7
        %v627 = vrot.slane %v611, 7
        %v636 = vadd.f32 %v584, %v620
        %v637 = vadd.f32 %v585, %v620
        %v638 = vadd.f32 %v586, %v621
        %v639 = vadd.f32 %v587, %v621
        %v640 = vadd.f32 %v588, %v622
        %v641 = vadd.f32 %v589, %v622
        %v642 = vadd.f32 %v590, %v623
        %v643 = vadd.f32 %v591, %v623
        %v644 = vadd.f32 %v592, %v624
        %v645 = vadd.f32 %v593, %v624
        %v646 = vadd.f32 %v594, %v625
        %v647 = vadd.f32 %v595, %v625
        %v648 = vadd.f32 %v596, %v626
        %v649 = vadd.f32 %v597, %v626
        %v650 = vadd.f32 %v598, %v627
        %v651 = vadd.f32 %v599, %v627
        %v652 = vlaneseq
        %v653 = vshrl.u32 %v652, 7
        %v654 = vsub.s32 5, %v653
        %v655 = vrot.slane %v397, %v654
        %v656 = vmul.f32 %v379, %v655
        %v657 = vmul.f32 %v380, %v655
        %v658 = vmul.f32 %v381, %v655
        %v659 = vmul.f32 %v382, %v655
        %v660 = vmul.f32 %v383, %v655
        %v661 = vmul.f32 %v384, %v655
        %v662 = vmul.f32 %v385, %v655
        %v663 = vmul.f32 %v386, %v655
        %v664 = vmul.f32 %v387, %v655
        %v665 = vmul.f32 %v388, %v655
        %v666 = vmul.f32 %v389, %v655
        %v667 = vmul.f32 %v390, %v655
        %v668 = vmul.f32 %v391, %v655
        %v669 = vmul.f32 %v392, %v655
        %v670 = vmul.f32 %v393, %v655
        %v671 = vmul.f32 %v394, %v655
        %v688 = vrot.slane %v656, 1
        %v689 = vrot.slane %v657, 1
        %v690 = vsel %vm543, %v688, %v689
        %v691 = vrot.slane %v658, 1
        %v692 = vrot.slane %v659, 1
        %v693 = vsel %vm543, %v691, %v692
        %v694 = vrot.slane %v660, 1
        %v695 = vrot.slane %v661, 1
        %v696 = vsel %vm543, %v694, %v695
        %v697 = vrot.slane %v662, 1
        %v698 = vrot.slane %v663, 1
        %v699 = vsel %vm543, %v697, %v698
        %v700 = vrot.slane %v664, 1
        %v701 = vrot.slane %v665, 1
        %v702 = vsel %vm543, %v700, %v701
        %v703 = vrot.slane %v666, 1
        %v704 = vrot.slane %v667, 1
        %v705 = vsel %vm543, %v703, %v704
        %v706 = vrot.slane %v668, 1
        %v707 = vrot.slane %v669, 1
        %v708 = vsel %vm543, %v706, %v707
        %v709 = vrot.slane %v670, 1
        %v710 = vrot.slane %v671, 1
        %v711 = vsel %vm543, %v709, %v710
        %v728 = vadd.f32 %v636, %v690
        %v729 = vadd.f32 %v637, %v689
        %v730 = vadd.f32 %v638, %v693
        %v731 = vadd.f32 %v639, %v692
        %v732 = vadd.f32 %v640, %v696
        %v733 = vadd.f32 %v641, %v695
        %v734 = vadd.f32 %v642, %v699
        %v735 = vadd.f32 %v643, %v698
        %v736 = vadd.f32 %v644, %v702
        %v737 = vadd.f32 %v645, %v701
        %v738 = vadd.f32 %v646, %v705
        %v739 = vadd.f32 %v647, %v704
        %v740 = vadd.f32 %v648, %v708
        %v741 = vadd.f32 %v649, %v707
        %v742 = vadd.f32 %v650, %v711
        %v743 = vadd.f32 %v651, %v710
        %v744 = vlaneseq
        %v745 = vshrl.u32 %v744, 7
        %v746 = vsub.s32 6, %v745
        %v747 = vrot.slane %v397, %v746
        %v748 = vmul.f32 %v381, %v747
        %v749 = vmul.f32 %v383, %v747
        %v750 = vmul.f32 %v385, %v747
        %v751 = vmul.f32 %v387, %v747
        %v752 = vmul.f32 %v389, %v747
        %v753 = vmul.f32 %v391, %v747
        %v754 = vmul.f32 %v393, %v747
        %v755 = vmul.f32 %v395, %v747
        %v764 = vrot.slane %v748, 7
        %v765 = vrot.slane %v749, 7
        %v766 = vrot.slane %v750, 7
        %v767 = vrot.slane %v751, 7
        %v768 = vrot.slane %v752, 7
        %v769 = vrot.slane %v753, 7
        %v770 = vrot.slane %v754, 7
        %v771 = vrot.slane %v755, 7
        %v780 = vadd.f32 %v728, %v764
        %v781 = vadd.f32 %v729, %v764
        %v782 = vadd.f32 %v730, %v765
        %v783 = vadd.f32 %v731, %v765
        %v784 = vadd.f32 %v732, %v766
        %v785 = vadd.f32 %v733, %v766
        %v786 = vadd.f32 %v734, %v767
        %v787 = vadd.f32 %v735, %v767
        %v788 = vadd.f32 %v736, %v768
        %v789 = vadd.f32 %v737, %v768
        %v790 = vadd.f32 %v738, %v769
        %v791 = vadd.f32 %v739, %v769
        %v792 = vadd.f32 %v740, %v770
        %v793 = vadd.f32 %v741, %v770
        %v794 = vadd.f32 %v742, %v771
        %v795 = vadd.f32 %v743, %v771
        %v796 = vlaneseq
        %v797 = vshrl.u32 %v796, 7
        %v798 = vsub.s32 7, %v797
        %v799 = vrot.slane %v397, %v798
        %v800 = vmul.f32 %v381, %v799
        %v801 = vmul.f32 %v382, %v799
        %v802 = vmul.f32 %v383, %v799
        %v803 = vmul.f32 %v384, %v799
        %v804 = vmul.f32 %v385, %v799
        %v805 = vmul.f32 %v386, %v799
        %v806 = vmul.f32 %v387, %v799
        %v807 = vmul.f32 %v388, %v799
        %v808 = vmul.f32 %v389, %v799
        %v809 = vmul.f32 %v390, %v799
        %v810 = vmul.f32 %v391, %v799
        %v811 = vmul.f32 %v392, %v799
        %v812 = vmul.f32 %v393, %v799
        %v813 = vmul.f32 %v394, %v799
        %v814 = vmul.f32 %v395, %v799
        %v815 = vmul.f32 %v396, %v799
        %v816 = vadd.f32 %v780, %v800
        %v817 = vadd.f32 %v781, %v801
        %v818 = vadd.f32 %v782, %v802
        %v819 = vadd.f32 %v783, %v803
        %v820 = vadd.f32 %v784, %v804
        %v821 = vadd.f32 %v785, %v805
        %v822 = vadd.f32 %v786, %v806
        %v823 = vadd.f32 %v787, %v807
        %v824 = vadd.f32 %v788, %v808
        %v825 = vadd.f32 %v789, %v809
        %v826 = vadd.f32 %v790, %v810
        %v827 = vadd.f32 %v791, %v811
        %v828 = vadd.f32 %v792, %v812
        %v829 = vadd.f32 %v793, %v813
        %v830 = vadd.f32 %v794, %v814
        %v831 = vadd.f32 %v795, %v815
        %v832 = vlaneseq
        %v833 = vshrl.u32 %v832, 7
        %v834 = vsub.s32 0, %v833
        %v835 = vrot.slane %v398, %v834
        %v836 = vmul.f32 %v381, %v835
        %v837 = vmul.f32 %v382, %v835
        %v838 = vmul.f32 %v383, %v835
        %v839 = vmul.f32 %v384, %v835
        %v840 = vmul.f32 %v385, %v835
        %v841 = vmul.f32 %v386, %v835
        %v842 = vmul.f32 %v387, %v835
        %v843 = vmul.f32 %v388, %v835
        %v844 = vmul.f32 %v389, %v835
        %v845 = vmul.f32 %v390, %v835
        %v846 = vmul.f32 %v391, %v835
        %v847 = vmul.f32 %v392, %v835
        %v848 = vmul.f32 %v393, %v835
        %v849 = vmul.f32 %v394, %v835
        %v850 = vmul.f32 %v395, %v835
        %v851 = vmul.f32 %v396, %v835
        %v868 = vrot.slane %v836, 1
        %v869 = vrot.slane %v837, 1
        %v870 = vsel %vm543, %v868, %v869
        %v871 = vrot.slane %v838, 1
        %v872 = vrot.slane %v839, 1
        %v873 = vsel %vm543, %v871, %v872
        %v874 = vrot.slane %v840, 1
        %v875 = vrot.slane %v841, 1
        %v876 = vsel %vm543, %v874, %v875
        %v877 = vrot.slane %v842, 1
        %v878 = vrot.slane %v843, 1
        %v879 = vsel %vm543, %v877, %v878
        %v880 = vrot.slane %v844, 1
        %v881 = vrot.slane %v845, 1
        %v882 = vsel %vm543, %v880, %v881
        %v883 = vrot.slane %v846, 1
        %v884 = vrot.slane %v847, 1
        %v885 = vsel %vm543, %v883, %v884
        %v886 = vrot.slane %v848, 1
        %v887 = vrot.slane %v849, 1
        %v888 = vsel %vm543, %v886, %v887
        %v889 = vrot.slane %v850, 1
        %v890 = vrot.slane %v851, 1
        %v891 = vsel %vm543, %v889, %v890
        %v908 = vadd.f32 %v816, %v870
        %v909 = vadd.f32 %v817, %v869
        %v910 = vadd.f32 %v818, %v873
        %v911 = vadd.f32 %v819, %v872
        %v912 = vadd.f32 %v820, %v876
        %v913 = vadd.f32 %v821, %v875
        %v914 = vadd.f32 %v822, %v879
        %v915 = vadd.f32 %v823, %v878
        %v916 = vadd.f32 %v824, %v882
        %v917 = vadd.f32 %v825, %v881
        %v918 = vadd.f32 %v826, %v885
        %v919 = vadd.f32 %v827, %v884
        %v920 = vadd.f32 %v828, %v888
        %v921 = vadd.f32 %v829, %v887
        %v922 = vadd.f32 %v830, %v891
        %v923 = vadd.f32 %v831, %v890
        %v940 = vrot.slane %v908, 1
        %v941 = vrot.slane %v909, 1
        %v942 = vsel %vm543, %v940, %v941
        %v943 = vrot.slane %v910, 1
        %v944 = vrot.slane %v911, 1
        %v945 = vsel %vm543, %v943, %v944
        %v946 = vrot.slane %v912, 1
        %v947 = vrot.slane %v913, 1
        %v948 = vsel %vm543, %v946, %v947
        %v949 = vrot.slane %v914, 1
        %v950 = vrot.slane %v915, 1
        %v951 = vsel %vm543, %v949, %v950
        %v952 = vrot.slane %v916, 1
        %v953 = vrot.slane %v917, 1
        %v954 = vsel %vm543, %v952, %v953
        %v955 = vrot.slane %v918, 1
        %v956 = vrot.slane %v919, 1
        %v957 = vsel %vm543, %v955, %v956
        %v958 = vrot.slane %v920, 1
        %v959 = vrot.slane %v921, 1
        %v960 = vsel %vm543, %v958, %v959
        %v961 = vrot.slane %v922, 1
        %v962 = vrot.slane %v923, 1
        %v963 = vsel %vm543, %v961, %v962
        %v972 = vpack.c.bf16 %v945, %v942
        %v973 = vpack.c.bf16 %v951, %v948
        %v974 = vpack.c.bf16 %v957, %v954
        %v975 = vpack.c.bf16 %v963, %v960
        %v976 = vld [vmem:[#allocation5] sm:$0xff]
        %v977 = vld [vmem:[#allocation5 + $0x8] sm:$0xff]
        %v978 = vld [vmem:[#allocation5 + $0x10] sm:$0xff]
        %v979 = vld [vmem:[#allocation5 + $0x18] sm:$0xff]
        %v980 = vld [vmem:[#allocation5 + $0x20] sm:$0xff]
        %v981 = vld [vmem:[#allocation5 + $0x28] sm:$0xff]
        %v982 = vld [vmem:[#allocation5 + $0x30] sm:$0xff]
        %v983 = vld [vmem:[#allocation5 + $0x38] sm:$0xff]
        %v984 = vld [vmem:[#allocation5 + $0x40] sm:$0xff]
        %v985 = vld [vmem:[#allocation5 + $0x48] sm:$0xff]
        %v986 = vld [vmem:[#allocation5 + $0x50] sm:$0xff]
        %v987 = vld [vmem:[#allocation5 + $0x58] sm:$0xff]
        %v988 = vld [vmem:[#allocation5 + $0x60] sm:$0xff]
        %v989 = vld [vmem:[#allocation5 + $0x68] sm:$0xff]
        %v990 = vld [vmem:[#allocation5 + $0x70] sm:$0xff]
        %v991 = vld [vmem:[#allocation5 + $0x78] sm:$0xff]
        %v992 = vld [vmem:[%s3] sm:$0x3]
        %v994 = vlaneseq
        %v995 = vshrl.u32 %v994, 7
        %v996 = vsub.s32 0, %v995
        %v997 = vrot.slane %v992, %v996
        %v998 = vlaneseq
        %v999 = vshrl.u32 %v998, 7
        %v1000 = vsub.s32 1, %v999
        %v1001 = vrot.slane %v992, %v1000
        %v1020 = vunpack.c.l.b16 %v976
        %v1021 = vunpack.c.h.b16 %v976
        %v1022 = vunpack.c.l.b16 %v977
        %v1023 = vunpack.c.h.b16 %v977
        %v1024 = vunpack.c.l.b16 %v978
        %v1025 = vunpack.c.h.b16 %v978
        %v1026 = vunpack.c.l.b16 %v979
        %v1027 = vunpack.c.h.b16 %v979
        %v1028 = vunpack.c.l.b16 %v980
        %v1029 = vunpack.c.h.b16 %v980
        %v1030 = vunpack.c.l.b16 %v981
        %v1031 = vunpack.c.h.b16 %v981
        %v1032 = vunpack.c.l.b16 %v982
        %v1033 = vunpack.c.h.b16 %v982
        %v1034 = vunpack.c.l.b16 %v983
        %v1035 = vunpack.c.h.b16 %v983
        %v1036 = vunpack.c.l.b16 %v984
        %v1037 = vunpack.c.h.b16 %v984
        %v1038 = vunpack.c.l.b16 %v985
        %v1039 = vunpack.c.h.b16 %v985
        %v1040 = vunpack.c.l.b16 %v986
        %v1041 = vunpack.c.h.b16 %v986
        %v1042 = vunpack.c.l.b16 %v987
        %v1043 = vunpack.c.h.b16 %v987
        %v1044 = vunpack.c.l.b16 %v988
        %v1045 = vunpack.c.h.b16 %v988
        %v1046 = vunpack.c.l.b16 %v989
        %v1047 = vunpack.c.h.b16 %v989
        %v1048 = vunpack.c.l.b16 %v990
        %v1049 = vunpack.c.h.b16 %v990
        %v1050 = vunpack.c.l.b16 %v991
        %v1051 = vunpack.c.h.b16 %v991
        %v1052 = vpack.c.b16 %v1022, %v1020
        %v1053 = vpack.c.b16 %v1023, %v1021
        %v1054 = vpack.c.b16 %v1026, %v1024
        %v1055 = vpack.c.b16 %v1027, %v1025
        %v1056 = vpack.c.b16 %v1030, %v1028
        %v1057 = vpack.c.b16 %v1031, %v1029
        %v1058 = vpack.c.b16 %v1034, %v1032
        %v1059 = vpack.c.b16 %v1035, %v1033
        %v1060 = vpack.c.b16 %v1038, %v1036
        %v1061 = vpack.c.b16 %v1039, %v1037
        %v1062 = vpack.c.b16 %v1042, %v1040
        %v1063 = vpack.c.b16 %v1043, %v1041
        %v1064 = vpack.c.b16 %v1046, %v1044
        %v1065 = vpack.c.b16 %v1047, %v1045
        %v1066 = vpack.c.b16 %v1050, %v1048
        %v1067 = vpack.c.b16 %v1051, %v1049
        %1084 = vmatprep.subr.bf16.mxu0 %v1067
        %1085 = vmatpush1.bf16.msra.mxu0 %v1066
        %1086 = vmatprep.subr.bf16.mxu0 %v1065
        %1087 = vmatpush1.bf16.msra.mxu0 %v1064
        %1088 = vmatprep.subr.bf16.mxu0 %v1063
        %1089 = vmatpush1.bf16.msra.mxu0 %v1062
        %1090 = vmatprep.subr.bf16.mxu0 %v1061
        %1091 = vmatpush1.bf16.msra.mxu0 %v1060
        %1092 = vmatprep.subr.bf16.mxu0 %v1059
        %1093 = vmatpush1.bf16.msra.mxu0 %v1058
        %1094 = vmatprep.subr.bf16.mxu0 %v1057
        %1095 = vmatpush1.bf16.msra.mxu0 %v1056
        %1096 = vmatprep.subr.bf16.mxu0 %v1055
        %1097 = vmatpush1.bf16.msra.mxu0 %v1054
        %1098 = vmatprep.subr.bf16.mxu0 %v1053
        %1099 = vmatpush1.bf16.msra.mxu0 %v1052
        %1100 = vmatprep.subr.bf16.mxu0 0
        %1101 = vmatpush2.bf16.msra.mxu0 0
        %1102 = vmatprep.subr.bf16.mxu0 0
        %1103 = vmatpush2.bf16.msra.mxu0 0
        %1104 = vmatprep.subr.bf16.mxu0 0
        %1105 = vmatpush2.bf16.msra.mxu0 0
        %1106 = vmatprep.subr.bf16.mxu0 0
        %1107 = vmatpush2.bf16.msra.mxu0 0
        %1108 = vmatprep.subr.bf16.mxu0 0
        %1109 = vmatpush2.bf16.msra.mxu0 0
        %1110 = vmatprep.subr.bf16.mxu0 0
        %1111 = vmatpush2.bf16.msra.mxu0 0
        %1112 = vmatprep.subr.bf16.mxu0 0
        %1113 = vmatpush2.bf16.msra.mxu0 0
        %1114 = vmatprep.subr.bf16.mxu0 0
        %1115 = vmatpush2.bf16.msra.mxu0 0
        %1116 = vmatprep.mubr.bf16.mxu0 0
        %1117 = vmatmul.mubr.bf16.gmra.mxu0 %v972
        %v1118 = vpop.f32.mrf.mxu0
        %v1119 = vadd.f32 %v997, %v1118
        %v1120 = vpop.f32.mrf.mxu0
        %v1121 = vadd.f32 %v1001, %v1120
        %v1122 = vpop.f32.mrf.mxu0
        %v1123 = vadd.f32 %v997, %v1122
        %v1124 = vpop.f32.mrf.mxu0
        %v1125 = vadd.f32 %v1001, %v1124
        %1126 = vmatprep.mubr.bf16.mxu0 0
        %1127 = vmatmul.mubr.bf16.gmra.mxu0 %v973
        %v1128 = vpop.f32.mrf.mxu0
        %v1129 = vadd.f32 %v997, %v1128
        %v1130 = vpop.f32.mrf.mxu0
        %v1131 = vadd.f32 %v1001, %v1130
        %v1132 = vpop.f32.mrf.mxu0
        %v1133 = vadd.f32 %v997, %v1132
        %v1134 = vpop.f32.mrf.mxu0
        %v1135 = vadd.f32 %v1001, %v1134
        %1136 = vmatprep.mubr.bf16.mxu0 0
        %1137 = vmatmul.mubr.bf16.gmra.mxu0 %v974
        %v1138 = vpop.f32.mrf.mxu0
        %v1139 = vadd.f32 %v997, %v1138
        %v1140 = vpop.f32.mrf.mxu0
        %v1141 = vadd.f32 %v1001, %v1140
        %v1142 = vpop.f32.mrf.mxu0
        %v1143 = vadd.f32 %v997, %v1142
        %v1144 = vpop.f32.mrf.mxu0
        %v1145 = vadd.f32 %v1001, %v1144
        %1146 = vmatprep.mubr.bf16.mxu0 0
        %1147 = vmatmul.mubr.bf16.gmra.mxu0 %v975
        %v1148 = vpop.f32.mrf.mxu0
        %v1149 = vadd.f32 %v997, %v1148
        %v1150 = vpop.f32.mrf.mxu0
        %v1151 = vadd.f32 %v1001, %v1150
        %v1152 = vpop.f32.mrf.mxu0
        %v1153 = vadd.f32 %v997, %v1152
        %v1154 = vpop.f32.mrf.mxu0
        %v1155 = vadd.f32 %v1001, %v1154
        %1156 = vdwg.mxu0
        %v1157 = vpack.c.bf16 %v1123, %v1119
        %v1158 = vpack.c.bf16 %v1125, %v1121
        %v1159 = vpack.c.bf16 %v1133, %v1129
        %v1160 = vpack.c.bf16 %v1135, %v1131
        %v1161 = vpack.c.bf16 %v1143, %v1139
        %v1162 = vpack.c.bf16 %v1145, %v1141
        %v1163 = vpack.c.bf16 %v1153, %v1149
        %v1164 = vpack.c.bf16 %v1155, %v1151
        %v1165 = vld [vmem:[%s4] sm:$0xff]
        %v1166 = vld [vmem:[%s4 + $0x8] sm:$0xff]
        %v1167 = vld [vmem:[%s4 + $0x10] sm:$0xff]
        %v1168 = vld [vmem:[%s4 + $0x18] sm:$0xff]
        %v1169 = vld [vmem:[%s4 + $0x20] sm:$0xff]
        %v1170 = vld [vmem:[%s4 + $0x28] sm:$0xff]
        %v1171 = vld [vmem:[%s4 + $0x30] sm:$0xff]
        %v1172 = vld [vmem:[%s4 + $0x38] sm:$0xff]
        %v1173 = vld [vmem:[%s4 + $0x40] sm:$0xff]
        %v1174 = vld [vmem:[%s4 + $0x48] sm:$0xff]
        %v1175 = vld [vmem:[%s4 + $0x50] sm:$0xff]
        %v1176 = vld [vmem:[%s4 + $0x58] sm:$0xff]
        %v1177 = vld [vmem:[%s4 + $0x60] sm:$0xff]
        %v1178 = vld [vmem:[%s4 + $0x68] sm:$0xff]
        %v1179 = vld [vmem:[%s4 + $0x70] sm:$0xff]
        %v1180 = vld [vmem:[%s4 + $0x78] sm:$0xff]
        %v1181 = vld [vmem:[%s4 + $0x80] sm:$0xff]
        %v1182 = vld [vmem:[%s4 + $0x88] sm:$0xff]
        %v1183 = vld [vmem:[%s4 + $0x90] sm:$0xff]
        %v1184 = vld [vmem:[%s4 + $0x98] sm:$0xff]
        %v1185 = vld [vmem:[%s4 + $0xa0] sm:$0xff]
        %v1186 = vld [vmem:[%s4 + $0xa8] sm:$0xff]
        %v1187 = vld [vmem:[%s4 + $0xb0] sm:$0xff]
        %v1188 = vld [vmem:[%s4 + $0xb8] sm:$0xff]
        %v1189 = vld [vmem:[%s4 + $0xc0] sm:$0xff]
        %v1190 = vld [vmem:[%s4 + $0xc8] sm:$0xff]
        %v1191 = vld [vmem:[%s4 + $0xd0] sm:$0xff]
        %v1192 = vld [vmem:[%s4 + $0xd8] sm:$0xff]
        %v1193 = vld [vmem:[%s4 + $0xe0] sm:$0xff]
        %v1194 = vld [vmem:[%s4 + $0xe8] sm:$0xff]
        %v1195 = vld [vmem:[%s4 + $0xf0] sm:$0xff]
        %v1196 = vld [vmem:[%s4 + $0xf8] sm:$0xff]
        %v1197 = vld [vmem:[%s4 + $0x100] sm:$0xff]
        %v1198 = vld [vmem:[%s4 + $0x108] sm:$0xff]
        %v1199 = vld [vmem:[%s4 + $0x110] sm:$0xff]
        %v1200 = vld [vmem:[%s4 + $0x118] sm:$0xff]
        %v1201 = vld [vmem:[%s4 + $0x120] sm:$0xff]
        %v1202 = vld [vmem:[%s4 + $0x128] sm:$0xff]
        %v1203 = vld [vmem:[%s4 + $0x130] sm:$0xff]
        %v1204 = vld [vmem:[%s4 + $0x138] sm:$0xff]
        %v1205 = vld [vmem:[%s4 + $0x140] sm:$0xff]
        %v1206 = vld [vmem:[%s4 + $0x148] sm:$0xff]
        %v1207 = vld [vmem:[%s4 + $0x150] sm:$0xff]
        %v1208 = vld [vmem:[%s4 + $0x158] sm:$0xff]
        %v1209 = vld [vmem:[%s4 + $0x160] sm:$0xff]
        %v1210 = vld [vmem:[%s4 + $0x168] sm:$0xff]
        %v1211 = vld [vmem:[%s4 + $0x170] sm:$0xff]
        %v1212 = vld [vmem:[%s4 + $0x178] sm:$0xff]
        %v1213 = vld [vmem:[%s4 + $0x180] sm:$0xff]
        %v1214 = vld [vmem:[%s4 + $0x188] sm:$0xff]
        %v1215 = vld [vmem:[%s4 + $0x190] sm:$0xff]
        %v1216 = vld [vmem:[%s4 + $0x198] sm:$0xff]
        %v1217 = vld [vmem:[%s4 + $0x1a0] sm:$0xff]
        %v1218 = vld [vmem:[%s4 + $0x1a8] sm:$0xff]
        %v1219 = vld [vmem:[%s4 + $0x1b0] sm:$0xff]
        %v1220 = vld [vmem:[%s4 + $0x1b8] sm:$0xff]
        %v1221 = vld [vmem:[%s4 + $0x1c0] sm:$0xff]
        %v1222 = vld [vmem:[%s4 + $0x1c8] sm:$0xff]
        %v1223 = vld [vmem:[%s4 + $0x1d0] sm:$0xff]
        %v1224 = vld [vmem:[%s4 + $0x1d8] sm:$0xff]
        %v1225 = vld [vmem:[%s4 + $0x1e0] sm:$0xff]
        %v1226 = vld [vmem:[%s4 + $0x1e8] sm:$0xff]
        %v1227 = vld [vmem:[%s4 + $0x1f0] sm:$0xff]
        %v1228 = vld [vmem:[%s4 + $0x1f8] sm:$0xff]
        %v1229 = vld [vmem:[%s5] sm:$0xf]
        %v1231 = vlaneseq
        %v1232 = vshrl.u32 %v1231, 7
        %v1233 = vsub.s32 0, %v1232
        %v1234 = vrot.slane %v1229, %v1233
        %v1235 = vlaneseq
        %v1236 = vshrl.u32 %v1235, 7
        %v1237 = vsub.s32 1, %v1236
        %v1238 = vrot.slane %v1229, %v1237
        %v1239 = vlaneseq
        %v1240 = vshrl.u32 %v1239, 7
        %v1241 = vsub.s32 2, %v1240
        %v1242 = vrot.slane %v1229, %v1241
        %v1243 = vlaneseq
        %v1244 = vshrl.u32 %v1243, 7
        %v1245 = vsub.s32 3, %v1244
        %v1246 = vrot.slane %v1229, %v1245
        %v1315 = vunpack.c.l.b16 %v1165
        %v1316 = vunpack.c.h.b16 %v1165
        %v1317 = vunpack.c.l.b16 %v1166
        %v1318 = vunpack.c.h.b16 %v1166
        %v1319 = vunpack.c.l.b16 %v1167
        %v1320 = vunpack.c.h.b16 %v1167
        %v1321 = vunpack.c.l.b16 %v1168
        %v1322 = vunpack.c.h.b16 %v1168
        %v1323 = vunpack.c.l.b16 %v1169
        %v1324 = vunpack.c.h.b16 %v1169
        %v1325 = vunpack.c.l.b16 %v1170
        %v1326 = vunpack.c.h.b16 %v1170
        %v1327 = vunpack.c.l.b16 %v1171
        %v1328 = vunpack.c.h.b16 %v1171
        %v1329 = vunpack.c.l.b16 %v1172
        %v1330 = vunpack.c.h.b16 %v1172
        %v1331 = vunpack.c.l.b16 %v1173
        %v1332 = vunpack.c.h.b16 %v1173
        %v1333 = vunpack.c.l.b16 %v1174
        %v1334 = vunpack.c.h.b16 %v1174
        %v1335 = vunpack.c.l.b16 %v1175
        %v1336 = vunpack.c.h.b16 %v1175
        %v1337 = vunpack.c.l.b16 %v1176
        %v1338 = vunpack.c.h.b16 %v1176
        %v1339 = vunpack.c.l.b16 %v1177
        %v1340 = vunpack.c.h.b16 %v1177
        %v1341 = vunpack.c.l.b16 %v1178
        %v1342 = vunpack.c.h.b16 %v1178
        %v1343 = vunpack.c.l.b16 %v1179
        %v1344 = vunpack.c.h.b16 %v1179
        %v1345 = vunpack.c.l.b16 %v1180
        %v1346 = vunpack.c.h.b16 %v1180
        %v1347 = vunpack.c.l.b16 %v1181
        %v1348 = vunpack.c.h.b16 %v1181
        %v1349 = vunpack.c.l.b16 %v1182
        %v1350 = vunpack.c.h.b16 %v1182
        %v1351 = vunpack.c.l.b16 %v1183
        %v1352 = vunpack.c.h.b16 %v1183
        %v1353 = vunpack.c.l.b16 %v1184
        %v1354 = vunpack.c.h.b16 %v1184
        %v1355 = vunpack.c.l.b16 %v1185
        %v1356 = vunpack.c.h.b16 %v1185
        %v1357 = vunpack.c.l.b16 %v1186
        %v1358 = vunpack.c.h.b16 %v1186
        %v1359 = vunpack.c.l.b16 %v1187
        %v1360 = vunpack.c.h.b16 %v1187
        %v1361 = vunpack.c.l.b16 %v1188
        %v1362 = vunpack.c.h.b16 %v1188
        %v1363 = vunpack.c.l.b16 %v1189
        %v1364 = vunpack.c.h.b16 %v1189
        %v1365 = vunpack.c.l.b16 %v1190
        %v1366 = vunpack.c.h.b16 %v1190
        %v1367 = vunpack.c.l.b16 %v1191
        %v1368 = vunpack.c.h.b16 %v1191
        %v1369 = vunpack.c.l.b16 %v1192
        %v1370 = vunpack.c.h.b16 %v1192
        %v1371 = vunpack.c.l.b16 %v1193
        %v1372 = vunpack.c.h.b16 %v1193
        %v1373 = vunpack.c.l.b16 %v1194
        %v1374 = vunpack.c.h.b16 %v1194
        %v1375 = vunpack.c.l.b16 %v1195
        %v1376 = vunpack.c.h.b16 %v1195
        %v1377 = vunpack.c.l.b16 %v1196
        %v1378 = vunpack.c.h.b16 %v1196
        %v1379 = vunpack.c.l.b16 %v1197
        %v1380 = vunpack.c.h.b16 %v1197
        %v1381 = vunpack.c.l.b16 %v1198
        %v1382 = vunpack.c.h.b16 %v1198
        %v1383 = vunpack.c.l.b16 %v1199
        %v1384 = vunpack.c.h.b16 %v1199
        %v1385 = vunpack.c.l.b16 %v1200
        %v1386 = vunpack.c.h.b16 %v1200
        %v1387 = vunpack.c.l.b16 %v1201
        %v1388 = vunpack.c.h.b16 %v1201
        %v1389 = vunpack.c.l.b16 %v1202
        %v1390 = vunpack.c.h.b16 %v1202
        %v1391 = vunpack.c.l.b16 %v1203
        %v1392 = vunpack.c.h.b16 %v1203
        %v1393 = vunpack.c.l.b16 %v1204
        %v1394 = vunpack.c.h.b16 %v1204
        %v1395 = vunpack.c.l.b16 %v1205
        %v1396 = vunpack.c.h.b16 %v1205
        %v1397 = vunpack.c.l.b16 %v1206
        %v1398 = vunpack.c.h.b16 %v1206
        %v1399 = vunpack.c.l.b16 %v1207
        %v1400 = vunpack.c.h.b16 %v1207
        %v1401 = vunpack.c.l.b16 %v1208
        %v1402 = vunpack.c.h.b16 %v1208
        %v1403 = vunpack.c.l.b16 %v1209
        %v1404 = vunpack.c.h.b16 %v1209
        %v1405 = vunpack.c.l.b16 %v1210
        %v1406 = vunpack.c.h.b16 %v1210
        %v1407 = vunpack.c.l.b16 %v1211
        %v1408 = vunpack.c.h.b16 %v1211
        %v1409 = vunpack.c.l.b16 %v1212
        %v1410 = vunpack.c.h.b16 %v1212
        %v1411 = vunpack.c.l.b16 %v1213
        %v1412 = vunpack.c.h.b16 %v1213
        %v1413 = vunpack.c.l.b16 %v1214
        %v1414 = vunpack.c.h.b16 %v1214
        %v1415 = vunpack.c.l.b16 %v1215
        %v1416 = vunpack.c.h.b16 %v1215
        %v1417 = vunpack.c.l.b16 %v1216
        %v1418 = vunpack.c.h.b16 %v1216
        %v1419 = vunpack.c.l.b16 %v1217
        %v1420 = vunpack.c.h.b16 %v1217
        %v1421 = vunpack.c.l.b16 %v1218
        %v1422 = vunpack.c.h.b16 %v1218
        %v1423 = vunpack.c.l.b16 %v1219
        %v1424 = vunpack.c.h.b16 %v1219
        %v1425 = vunpack.c.l.b16 %v1220
        %v1426 = vunpack.c.h.b16 %v1220
        %v1427 = vunpack.c.l.b16 %v1221
        %v1428 = vunpack.c.h.b16 %v1221
        %v1429 = vunpack.c.l.b16 %v1222
        %v1430 = vunpack.c.h.b16 %v1222
        %v1431 = vunpack.c.l.b16 %v1223
        %v1432 = vunpack.c.h.b16 %v1223
        %v1433 = vunpack.c.l.b16 %v1224
        %v1434 = vunpack.c.h.b16 %v1224
        %v1435 = vunpack.c.l.b16 %v1225
        %v1436 = vunpack.c.h.b16 %v1225
        %v1437 = vunpack.c.l.b16 %v1226
        %v1438 = vunpack.c.h.b16 %v1226
        %v1439 = vunpack.c.l.b16 %v1227
        %v1440 = vunpack.c.h.b16 %v1227
        %v1441 = vunpack.c.l.b16 %v1228
        %v1442 = vunpack.c.h.b16 %v1228
        %v1443 = vpack.c.b16 %v1319, %v1315
        %v1444 = vpack.c.b16 %v1320, %v1316
        %v1445 = vpack.c.b16 %v1321, %v1317
        %v1446 = vpack.c.b16 %v1322, %v1318
        %v1447 = vpack.c.b16 %v1327, %v1323
        %v1448 = vpack.c.b16 %v1328, %v1324
        %v1449 = vpack.c.b16 %v1329, %v1325
        %v1450 = vpack.c.b16 %v1330, %v1326
        %v1451 = vpack.c.b16 %v1335, %v1331
        %v1452 = vpack.c.b16 %v1336, %v1332
        %v1453 = vpack.c.b16 %v1337, %v1333
        %v1454 = vpack.c.b16 %v1338, %v1334
        %v1455 = vpack.c.b16 %v1343, %v1339
        %v1456 = vpack.c.b16 %v1344, %v1340
        %v1457 = vpack.c.b16 %v1345, %v1341
        %v1458 = vpack.c.b16 %v1346, %v1342
        %v1459 = vpack.c.b16 %v1351, %v1347
        %v1460 = vpack.c.b16 %v1352, %v1348
        %v1461 = vpack.c.b16 %v1353, %v1349
        %v1462 = vpack.c.b16 %v1354, %v1350
        %v1463 = vpack.c.b16 %v1359, %v1355
        %v1464 = vpack.c.b16 %v1360, %v1356
        %v1465 = vpack.c.b16 %v1361, %v1357
        %v1466 = vpack.c.b16 %v1362, %v1358
        %v1467 = vpack.c.b16 %v1367, %v1363
        %v1468 = vpack.c.b16 %v1368, %v1364
        %v1469 = vpack.c.b16 %v1369, %v1365
        %v1470 = vpack.c.b16 %v1370, %v1366
        %v1471 = vpack.c.b16 %v1375, %v1371
        %v1472 = vpack.c.b16 %v1376, %v1372
        %v1473 = vpack.c.b16 %v1377, %v1373
        %v1474 = vpack.c.b16 %v1378, %v1374
        %v1475 = vpack.c.b16 %v1383, %v1379
        %v1476 = vpack.c.b16 %v1384, %v1380
        %v1477 = vpack.c.b16 %v1385, %v1381
        %v1478 = vpack.c.b16 %v1386, %v1382
        %v1479 = vpack.c.b16 %v1391, %v1387
        %v1480 = vpack.c.b16 %v1392, %v1388
        %v1481 = vpack.c.b16 %v1393, %v1389
        %v1482 = vpack.c.b16 %v1394, %v1390
        %v1483 = vpack.c.b16 %v1399, %v1395
        %v1484 = vpack.c.b16 %v1400, %v1396
        %v1485 = vpack.c.b16 %v1401, %v1397
        %v1486 = vpack.c.b16 %v1402, %v1398
        %v1487 = vpack.c.b16 %v1407, %v1403
        %v1488 = vpack.c.b16 %v1408, %v1404
        %v1489 = vpack.c.b16 %v1409, %v1405
        %v1490 = vpack.c.b16 %v1410, %v1406
        %v1491 = vpack.c.b16 %v1415, %v1411
        %v1492 = vpack.c.b16 %v1416, %v1412
        %v1493 = vpack.c.b16 %v1417, %v1413
        %v1494 = vpack.c.b16 %v1418, %v1414
        %v1495 = vpack.c.b16 %v1423, %v1419
        %v1496 = vpack.c.b16 %v1424, %v1420
        %v1497 = vpack.c.b16 %v1425, %v1421
        %v1498 = vpack.c.b16 %v1426, %v1422
        %v1499 = vpack.c.b16 %v1431, %v1427
        %v1500 = vpack.c.b16 %v1432, %v1428
        %v1501 = vpack.c.b16 %v1433, %v1429
        %v1502 = vpack.c.b16 %v1434, %v1430
        %v1503 = vpack.c.b16 %v1439, %v1435
        %v1504 = vpack.c.b16 %v1440, %v1436
        %v1505 = vpack.c.b16 %v1441, %v1437
        %v1506 = vpack.c.b16 %v1442, %v1438
        %1571 = vmatprep.subr.bf16.mxu0 %v1472
        %1572 = vmatpush1.bf16.msra.mxu0 %v1471
        %1573 = vmatprep.subr.bf16.mxu0 %v1468
        %1574 = vmatpush1.bf16.msra.mxu0 %v1467
        %1575 = vmatprep.subr.bf16.mxu0 %v1464
        %1576 = vmatpush1.bf16.msra.mxu0 %v1463
        %1577 = vmatprep.subr.bf16.mxu0 %v1460
        %1578 = vmatpush1.bf16.msra.mxu0 %v1459
        %1579 = vmatprep.subr.bf16.mxu0 %v1456
        %1580 = vmatpush1.bf16.msra.mxu0 %v1455
        %1581 = vmatprep.subr.bf16.mxu0 %v1452
        %1582 = vmatpush1.bf16.msra.mxu0 %v1451
        %1583 = vmatprep.subr.bf16.mxu0 %v1448
        %1584 = vmatpush1.bf16.msra.mxu0 %v1447
        %1585 = vmatprep.subr.bf16.mxu0 %v1444
        %1586 = vmatpush1.bf16.msra.mxu0 %v1443
        %1587 = vmatprep.subr.bf16.mxu0 %v1504
        %1588 = vmatpush2.bf16.msra.mxu0 %v1503
        %1589 = vmatprep.subr.bf16.mxu0 %v1500
        %1590 = vmatpush2.bf16.msra.mxu0 %v1499
        %1591 = vmatprep.subr.bf16.mxu0 %v1496
        %1592 = vmatpush2.bf16.msra.mxu0 %v1495
        %1593 = vmatprep.subr.bf16.mxu0 %v1492
        %1594 = vmatpush2.bf16.msra.mxu0 %v1491
        %1595 = vmatprep.subr.bf16.mxu0 %v1488
        %1596 = vmatpush2.bf16.msra.mxu0 %v1487
        %1597 = vmatprep.subr.bf16.mxu0 %v1484
        %1598 = vmatpush2.bf16.msra.mxu0 %v1483
        %1599 = vmatprep.subr.bf16.mxu0 %v1480
        %1600 = vmatpush2.bf16.msra.mxu0 %v1479
        %1601 = vmatprep.subr.bf16.mxu0 %v1476
        %1602 = vmatpush2.bf16.msra.mxu0 %v1475
        %1603 = vmatprep.mubr.bf16.mxu0 %v1158
        %1604 = vmatmul.mubr.bf16.gmra.mxu0 %v1157
        %v1605 = vpop.f32.mrf.mxu0
        %v1606 = vadd.f32 %v1234, %v1605
        %v1607 = vpop.f32.mrf.mxu0
        %v1608 = vadd.f32 %v1238, %v1607
        %v1609 = vpop.f32.mrf.mxu0
        %v1610 = vadd.f32 %v1234, %v1609
        %v1611 = vpop.f32.mrf.mxu0
        %v1612 = vadd.f32 %v1238, %v1611
        %1613 = vmatprep.mubr.bf16.mxu0 %v1160
        %1614 = vmatmul.mubr.bf16.gmra.mxu0 %v1159
        %v1615 = vpop.f32.mrf.mxu0
        %v1616 = vadd.f32 %v1234, %v1615
        %v1617 = vpop.f32.mrf.mxu0
        %v1618 = vadd.f32 %v1238, %v1617
        %v1619 = vpop.f32.mrf.mxu0
        %v1620 = vadd.f32 %v1234, %v1619
        %v1621 = vpop.f32.mrf.mxu0
        %v1622 = vadd.f32 %v1238, %v1621
        %1623 = vmatprep.mubr.bf16.mxu0 %v1162
        %1624 = vmatmul.mubr.bf16.gmra.mxu0 %v1161
        %v1625 = vpop.f32.mrf.mxu0
        %v1626 = vadd.f32 %v1234, %v1625
        %v1627 = vpop.f32.mrf.mxu0
        %v1628 = vadd.f32 %v1238, %v1627
        %v1629 = vpop.f32.mrf.mxu0
        %v1630 = vadd.f32 %v1234, %v1629
        %v1631 = vpop.f32.mrf.mxu0
        %v1632 = vadd.f32 %v1238, %v1631
        %1633 = vmatprep.mubr.bf16.mxu0 %v1164
        %1634 = vmatmul.mubr.bf16.gmra.mxu0 %v1163
        %v1635 = vpop.f32.mrf.mxu0
        %v1636 = vadd.f32 %v1234, %v1635
        %v1637 = vpop.f32.mrf.mxu0
        %v1638 = vadd.f32 %v1238, %v1637
        %v1639 = vpop.f32.mrf.mxu0
        %v1640 = vadd.f32 %v1234, %v1639
        %v1641 = vpop.f32.mrf.mxu0
        %v1642 = vadd.f32 %v1238, %v1641
        %1643 = vdwg.mxu0
        %1644 = vmatprep.subr.bf16.mxu0 %v1474
        %1645 = vmatpush1.bf16.msra.mxu0 %v1473
        %1646 = vmatprep.subr.bf16.mxu0 %v1470
        %1647 = vmatpush1.bf16.msra.mxu0 %v1469
        %1648 = vmatprep.subr.bf16.mxu0 %v1466
        %1649 = vmatpush1.bf16.msra.mxu0 %v1465
        %1650 = vmatprep.subr.bf16.mxu0 %v1462
        %1651 = vmatpush1.bf16.msra.mxu0 %v1461
        %1652 = vmatprep.subr.bf16.mxu0 %v1458
        %1653 = vmatpush1.bf16.msra.mxu0 %v1457
        %1654 = vmatprep.subr.bf16.mxu0 %v1454
        %1655 = vmatpush1.bf16.msra.mxu0 %v1453
        %1656 = vmatprep.subr.bf16.mxu0 %v1450
        %1657 = vmatpush1.bf16.msra.mxu0 %v1449
        %1658 = vmatprep.subr.bf16.mxu0 %v1446
        %1659 = vmatpush1.bf16.msra.mxu0 %v1445
        %1660 = vmatprep.subr.bf16.mxu0 %v1506
        %1661 = vmatpush2.bf16.msra.mxu0 %v1505
        %1662 = vmatprep.subr.bf16.mxu0 %v1502
        %1663 = vmatpush2.bf16.msra.mxu0 %v1501
        %1664 = vmatprep.subr.bf16.mxu0 %v1498
        %1665 = vmatpush2.bf16.msra.mxu0 %v1497
        %1666 = vmatprep.subr.bf16.mxu0 %v1494
        %1667 = vmatpush2.bf16.msra.mxu0 %v1493
        %1668 = vmatprep.subr.bf16.mxu0 %v1490
        %1669 = vmatpush2.bf16.msra.mxu0 %v1489
        %1670 = vmatprep.subr.bf16.mxu0 %v1486
        %1671 = vmatpush2.bf16.msra.mxu0 %v1485
        %1672 = vmatprep.subr.bf16.mxu0 %v1482
        %1673 = vmatpush2.bf16.msra.mxu0 %v1481
        %1674 = vmatprep.subr.bf16.mxu0 %v1478
        %1675 = vmatpush2.bf16.msra.mxu0 %v1477
        %1676 = vmatprep.mubr.bf16.mxu0 %v1158
        %1677 = vmatmul.mubr.bf16.gmra.mxu0 %v1157
        %v1678 = vpop.f32.mrf.mxu0
        %v1679 = vadd.f32 %v1242, %v1678
        %v1680 = vpop.f32.mrf.mxu0
        %v1681 = vadd.f32 %v1246, %v1680
        %v1682 = vpop.f32.mrf.mxu0
        %v1683 = vadd.f32 %v1242, %v1682
        %v1684 = vpop.f32.mrf.mxu0
        %v1685 = vadd.f32 %v1246, %v1684
        %1686 = vmatprep.mubr.bf16.mxu0 %v1160
        %1687 = vmatmul.mubr.bf16.gmra.mxu0 %v1159
        %v1688 = vpop.f32.mrf.mxu0
        %v1689 = vadd.f32 %v1242, %v1688
        %v1690 = vpop.f32.mrf.mxu0
        %v1691 = vadd.f32 %v1246, %v1690
        %v1692 = vpop.f32.mrf.mxu0
        %v1693 = vadd.f32 %v1242, %v1692
        %v1694 = vpop.f32.mrf.mxu0
        %v1695 = vadd.f32 %v1246, %v1694
        %1696 = vmatprep.mubr.bf16.mxu0 %v1162
        %1697 = vmatmul.mubr.bf16.gmra.mxu0 %v1161
        %v1698 = vpop.f32.mrf.mxu0
        %v1699 = vadd.f32 %v1242, %v1698
        %v1700 = vpop.f32.mrf.mxu0
        %v1701 = vadd.f32 %v1246, %v1700
        %v1702 = vpop.f32.mrf.mxu0
        %v1703 = vadd.f32 %v1242, %v1702
        %v1704 = vpop.f32.mrf.mxu0
        %v1705 = vadd.f32 %v1246, %v1704
        %1706 = vmatprep.mubr.bf16.mxu0 %v1164
        %1707 = vmatmul.mubr.bf16.gmra.mxu0 %v1163
        %v1708 = vpop.f32.mrf.mxu0
        %v1709 = vadd.f32 %v1242, %v1708
        %v1710 = vpop.f32.mrf.mxu0
        %v1711 = vadd.f32 %v1246, %v1710
        %v1712 = vpop.f32.mrf.mxu0
        %v1713 = vadd.f32 %v1242, %v1712
        %v1714 = vpop.f32.mrf.mxu0
        %v1715 = vadd.f32 %v1246, %v1714
        %1716 = vdwg.mxu0
        %v1717 = vmul.f32 %v1606, 0.5
        %v1718 = vmul.f32 %v1608, 0.5
        %v1719 = vmul.f32 %v1679, 0.5
        %v1720 = vmul.f32 %v1681, 0.5
        %v1721 = vmul.f32 %v1610, 0.5
        %v1722 = vmul.f32 %v1612, 0.5
        %v1723 = vmul.f32 %v1683, 0.5
        %v1724 = vmul.f32 %v1685, 0.5
        %v1725 = vmul.f32 %v1616, 0.5
        %v1726 = vmul.f32 %v1618, 0.5
        %v1727 = vmul.f32 %v1689, 0.5
        %v1728 = vmul.f32 %v1691, 0.5
        %v1729 = vmul.f32 %v1620, 0.5
        %v1730 = vmul.f32 %v1622, 0.5
        %v1731 = vmul.f32 %v1693, 0.5
        %v1732 = vmul.f32 %v1695, 0.5
        %v1733 = vmul.f32 %v1626, 0.5
        %v1734 = vmul.f32 %v1628, 0.5
        %v1735 = vmul.f32 %v1699, 0.5
        %v1736 = vmul.f32 %v1701, 0.5
        %v1737 = vmul.f32 %v1630, 0.5
        %v1738 = vmul.f32 %v1632, 0.5
        %v1739 = vmul.f32 %v1703, 0.5
        %v1740 = vmul.f32 %v1705, 0.5
        %v1741 = vmul.f32 %v1636, 0.5
        %v1742 = vmul.f32 %v1638, 0.5
        %v1743 = vmul.f32 %v1709, 0.5
        %v1744 = vmul.f32 %v1711, 0.5
        %v1745 = vmul.f32 %v1640, 0.5
        %v1746 = vmul.f32 %v1642, 0.5
        %v1747 = vmul.f32 %v1713, 0.5
        %v1748 = vmul.f32 %v1715, 0.5
        %v1749 = vmul.f32 %v1606, 0.70710677
        %v1750 = vmul.f32 %v1608, 0.70710677
        %v1751 = vmul.f32 %v1679, 0.70710677
        %v1752 = vmul.f32 %v1681, 0.70710677
        %v1753 = vmul.f32 %v1610, 0.70710677
        %v1754 = vmul.f32 %v1612, 0.70710677
        %v1755 = vmul.f32 %v1683, 0.70710677
        %v1756 = vmul.f32 %v1685, 0.70710677
        %v1757 = vmul.f32 %v1616, 0.70710677
        %v1758 = vmul.f32 %v1618, 0.70710677
        %v1759 = vmul.f32 %v1689, 0.70710677
        %v1760 = vmul.f32 %v1691, 0.70710677
        %v1761 = vmul.f32 %v1620, 0.70710677
        %v1762 = vmul.f32 %v1622, 0.70710677
        %v1763 = vmul.f32 %v1693, 0.70710677
        %v1764 = vmul.f32 %v1695, 0.70710677
        %v1765 = vmul.f32 %v1626, 0.70710677
        %v1766 = vmul.f32 %v1628, 0.70710677
        %v1767 = vmul.f32 %v1699, 0.70710677
        %v1768 = vmul.f32 %v1701, 0.70710677
        %v1769 = vmul.f32 %v1630, 0.70710677
        %v1770 = vmul.f32 %v1632, 0.70710677
        %v1771 = vmul.f32 %v1703, 0.70710677
        %v1772 = vmul.f32 %v1705, 0.70710677
        %v1773 = vmul.f32 %v1636, 0.70710677
        %v1774 = vmul.f32 %v1638, 0.70710677
        %v1775 = vmul.f32 %v1709, 0.70710677
        %v1776 = vmul.f32 %v1711, 0.70710677
        %v1777 = vmul.f32 %v1640, 0.70710677
        %v1778 = vmul.f32 %v1642, 0.70710677
        %v1779 = vmul.f32 %v1713, 0.70710677
        %v1780 = vmul.f32 %v1715, 0.70710677
        %v1781 = verf.f32.pop %v1749
        %v1782 = verf.f32.pop %v1750
        %v1783 = verf.f32.pop %v1751
        %v1784 = verf.f32.pop %v1752
        %v1785 = verf.f32.pop %v1753
        %v1786 = verf.f32.pop %v1754
        %v1787 = verf.f32.pop %v1755
        %v1788 = verf.f32.pop %v1756
        %v1789 = verf.f32.pop %v1757
        %v1790 = verf.f32.pop %v1758
        %v1791 = verf.f32.pop %v1759
        %v1792 = verf.f32.pop %v1760
        %v1793 = verf.f32.pop %v1761
        %v1794 = verf.f32.pop %v1762
        %v1795 = verf.f32.pop %v1763
        %v1796 = verf.f32.pop %v1764
        %v1797 = verf.f32.pop %v1765
        %v1798 = verf.f32.pop %v1766
        %v1799 = verf.f32.pop %v1767
        %v1800 = verf.f32.pop %v1768
        %v1801 = verf.f32.pop %v1769
        %v1802 = verf.f32.pop %v1770
        %v1803 = verf.f32.pop %v1771
        %v1804 = verf.f32.pop %v1772
        %v1805 = verf.f32.pop %v1773
        %v1806 = verf.f32.pop %v1774
        %v1807 = verf.f32.pop %v1775
        %v1808 = verf.f32.pop %v1776
        %v1809 = verf.f32.pop %v1777
        %v1810 = verf.f32.pop %v1778
        %v1811 = verf.f32.pop %v1779
        %v1812 = verf.f32.pop %v1780
        %v1813 = vadd.f32 %v1781, 1.0
        %v1814 = vadd.f32 %v1782, 1.0
        %v1815 = vadd.f32 %v1783, 1.0
        %v1816 = vadd.f32 %v1784, 1.0
        %v1817 = vadd.f32 %v1785, 1.0
        %v1818 = vadd.f32 %v1786, 1.0
        %v1819 = vadd.f32 %v1787, 1.0
        %v1820 = vadd.f32 %v1788, 1.0
        %v1821 = vadd.f32 %v1789, 1.0
        %v1822 = vadd.f32 %v1790, 1.0
        %v1823 = vadd.f32 %v1791, 1.0
        %v1824 = vadd.f32 %v1792, 1.0
        %v1825 = vadd.f32 %v1793, 1.0
        %v1826 = vadd.f32 %v1794, 1.0
        %v1827 = vadd.f32 %v1795, 1.0
        %v1828 = vadd.f32 %v1796, 1.0
        %v1829 = vadd.f32 %v1797, 1.0
        %v1830 = vadd.f32 %v1798, 1.0
        %v1831 = vadd.f32 %v1799, 1.0
        %v1832 = vadd.f32 %v1800, 1.0
        %v1833 = vadd.f32 %v1801, 1.0
        %v1834 = vadd.f32 %v1802, 1.0
        %v1835 = vadd.f32 %v1803, 1.0
        %v1836 = vadd.f32 %v1804, 1.0
        %v1837 = vadd.f32 %v1805, 1.0
        %v1838 = vadd.f32 %v1806, 1.0
        %v1839 = vadd.f32 %v1807, 1.0
        %v1840 = vadd.f32 %v1808, 1.0
        %v1841 = vadd.f32 %v1809, 1.0
        %v1842 = vadd.f32 %v1810, 1.0
        %v1843 = vadd.f32 %v1811, 1.0
        %v1844 = vadd.f32 %v1812, 1.0
        %v1845 = vmul.f32 %v1717, %v1813
        %v1846 = vmul.f32 %v1718, %v1814
        %v1847 = vmul.f32 %v1719, %v1815
        %v1848 = vmul.f32 %v1720, %v1816
        %v1849 = vmul.f32 %v1721, %v1817
        %v1850 = vmul.f32 %v1722, %v1818
        %v1851 = vmul.f32 %v1723, %v1819
        %v1852 = vmul.f32 %v1724, %v1820
        %v1853 = vmul.f32 %v1725, %v1821
        %v1854 = vmul.f32 %v1726, %v1822
        %v1855 = vmul.f32 %v1727, %v1823
        %v1856 = vmul.f32 %v1728, %v1824
        %v1857 = vmul.f32 %v1729, %v1825
        %v1858 = vmul.f32 %v1730, %v1826
        %v1859 = vmul.f32 %v1731, %v1827
        %v1860 = vmul.f32 %v1732, %v1828
        %v1861 = vmul.f32 %v1733, %v1829
        %v1862 = vmul.f32 %v1734, %v1830
        %v1863 = vmul.f32 %v1735, %v1831
        %v1864 = vmul.f32 %v1736, %v1832
        %v1865 = vmul.f32 %v1737, %v1833
        %v1866 = vmul.f32 %v1738, %v1834
        %v1867 = vmul.f32 %v1739, %v1835
        %v1868 = vmul.f32 %v1740, %v1836
        %v1869 = vmul.f32 %v1741, %v1837
        %v1870 = vmul.f32 %v1742, %v1838
        %v1871 = vmul.f32 %v1743, %v1839
        %v1872 = vmul.f32 %v1744, %v1840
        %v1873 = vmul.f32 %v1745, %v1841
        %v1874 = vmul.f32 %v1746, %v1842
        %v1875 = vmul.f32 %v1747, %v1843
        %v1876 = vmul.f32 %v1748, %v1844
        %v1877 = vpack.c.bf16 %v1849, %v1845
        %v1878 = vpack.c.bf16 %v1850, %v1846
        %v1879 = vpack.c.bf16 %v1851, %v1847
        %v1880 = vpack.c.bf16 %v1852, %v1848
        %v1881 = vpack.c.bf16 %v1857, %v1853
        %v1882 = vpack.c.bf16 %v1858, %v1854
        %v1883 = vpack.c.bf16 %v1859, %v1855
        %v1884 = vpack.c.bf16 %v1860, %v1856
        %v1885 = vpack.c.bf16 %v1865, %v1861
        %v1886 = vpack.c.bf16 %v1866, %v1862
        %v1887 = vpack.c.bf16 %v1867, %v1863
        %v1888 = vpack.c.bf16 %v1868, %v1864
        %v1889 = vpack.c.bf16 %v1873, %v1869
        %v1890 = vpack.c.bf16 %v1874, %v1870
        %v1891 = vpack.c.bf16 %v1875, %v1871
        %v1892 = vpack.c.bf16 %v1876, %v1872
        %v1893 = vld [vmem:[#allocation7] sm:$0xf]
        %v1894 = vld [vmem:[#allocation7 + $0x4] sm:$0xf]
        %v1895 = vld [vmem:[#allocation7 + $0x8] sm:$0xf]
        %v1896 = vld [vmem:[#allocation7 + $0xc] sm:$0xf]
        %v1897 = vld [vmem:[#allocation7 + $0x10] sm:$0xf]
        %v1898 = vld [vmem:[#allocation7 + $0x14] sm:$0xf]
        %v1899 = vld [vmem:[#allocation7 + $0x18] sm:$0xf]
        %v1900 = vld [vmem:[#allocation7 + $0x1c] sm:$0xf]
        %v1901 = vld [vmem:[#allocation7 + $0x20] sm:$0xf]
        %v1902 = vld [vmem:[#allocation7 + $0x24] sm:$0xf]
        %v1903 = vld [vmem:[#allocation7 + $0x28] sm:$0xf]
        %v1904 = vld [vmem:[#allocation7 + $0x2c] sm:$0xf]
        %v1905 = vld [vmem:[#allocation7 + $0x30] sm:$0xf]
        %v1906 = vld [vmem:[#allocation7 + $0x34] sm:$0xf]
        %v1907 = vld [vmem:[#allocation7 + $0x38] sm:$0xf]
        %v1908 = vld [vmem:[#allocation7 + $0x3c] sm:$0xf]
        %v1909 = vld [vmem:[#allocation7 + $0x40] sm:$0xf]
        %v1910 = vld [vmem:[#allocation7 + $0x44] sm:$0xf]
        %v1911 = vld [vmem:[#allocation7 + $0x48] sm:$0xf]
        %v1912 = vld [vmem:[#allocation7 + $0x4c] sm:$0xf]
        %v1913 = vld [vmem:[#allocation7 + $0x50] sm:$0xf]
        %v1914 = vld [vmem:[#allocation7 + $0x54] sm:$0xf]
        %v1915 = vld [vmem:[#allocation7 + $0x58] sm:$0xf]
        %v1916 = vld [vmem:[#allocation7 + $0x5c] sm:$0xf]
        %v1917 = vld [vmem:[#allocation7 + $0x60] sm:$0xf]
        %v1918 = vld [vmem:[#allocation7 + $0x64] sm:$0xf]
        %v1919 = vld [vmem:[#allocation7 + $0x68] sm:$0xf]
        %v1920 = vld [vmem:[#allocation7 + $0x6c] sm:$0xf]
        %v1921 = vld [vmem:[#allocation7 + $0x70] sm:$0xf]
        %v1922 = vld [vmem:[#allocation7 + $0x74] sm:$0xf]
        %v1923 = vld [vmem:[#allocation7 + $0x78] sm:$0xf]
        %v1924 = vld [vmem:[#allocation7 + $0x7c] sm:$0xf]
        %v1925 = vld [vmem:[#allocation7 + $0x80] sm:$0xf]
        %v1926 = vld [vmem:[#allocation7 + $0x84] sm:$0xf]
        %v1927 = vld [vmem:[#allocation7 + $0x88] sm:$0xf]
        %v1928 = vld [vmem:[#allocation7 + $0x8c] sm:$0xf]
        %v1929 = vld [vmem:[#allocation7 + $0x90] sm:$0xf]
        %v1930 = vld [vmem:[#allocation7 + $0x94] sm:$0xf]
        %v1931 = vld [vmem:[#allocation7 + $0x98] sm:$0xf]
        %v1932 = vld [vmem:[#allocation7 + $0x9c] sm:$0xf]
        %v1933 = vld [vmem:[#allocation7 + $0xa0] sm:$0xf]
        %v1934 = vld [vmem:[#allocation7 + $0xa4] sm:$0xf]
        %v1935 = vld [vmem:[#allocation7 + $0xa8] sm:$0xf]
        %v1936 = vld [vmem:[#allocation7 + $0xac] sm:$0xf]
        %v1937 = vld [vmem:[#allocation7 + $0xb0] sm:$0xf]
        %v1938 = vld [vmem:[#allocation7 + $0xb4] sm:$0xf]
        %v1939 = vld [vmem:[#allocation7 + $0xb8] sm:$0xf]
        %v1940 = vld [vmem:[#allocation7 + $0xbc] sm:$0xf]
        %v1941 = vld [vmem:[#allocation7 + $0xc0] sm:$0xf]
        %v1942 = vld [vmem:[#allocation7 + $0xc4] sm:$0xf]
        %v1943 = vld [vmem:[#allocation7 + $0xc8] sm:$0xf]
        %v1944 = vld [vmem:[#allocation7 + $0xcc] sm:$0xf]
        %v1945 = vld [vmem:[#allocation7 + $0xd0] sm:$0xf]
        %v1946 = vld [vmem:[#allocation7 + $0xd4] sm:$0xf]
        %v1947 = vld [vmem:[#allocation7 + $0xd8] sm:$0xf]
        %v1948 = vld [vmem:[#allocation7 + $0xdc] sm:$0xf]
        %v1949 = vld [vmem:[#allocation7 + $0xe0] sm:$0xf]
        %v1950 = vld [vmem:[#allocation7 + $0xe4] sm:$0xf]
        %v1951 = vld [vmem:[#allocation7 + $0xe8] sm:$0xf]
        %v1952 = vld [vmem:[#allocation7 + $0xec] sm:$0xf]
        %v1953 = vld [vmem:[#allocation7 + $0xf0] sm:$0xf]
        %v1954 = vld [vmem:[#allocation7 + $0xf4] sm:$0xf]
        %v1955 = vld [vmem:[#allocation7 + $0xf8] sm:$0xf]
        %v1956 = vld [vmem:[#allocation7 + $0xfc] sm:$0xf]
        %v1957 = vld [vmem:[%s7] sm:$0x1]
        %v1959 = vlaneseq
        %v1960 = vshrl.u32 %v1959, 7
        %v1961 = vsub.s32 0, %v1960
        %v1962 = vrot.slane %v1957, %v1961
        %v2028 = vunpack.c.l.b16 %v1893
        %v2029 = vunpack.c.l.b16 %v1894
        %v2030 = vunpack.c.l.b16 %v1895
        %v2031 = vunpack.c.l.b16 %v1896
        %v2032 = vunpack.c.l.b16 %v1897
        %v2033 = vunpack.c.l.b16 %v1898
        %v2034 = vunpack.c.l.b16 %v1899
        %v2035 = vunpack.c.l.b16 %v1900
        %v2036 = vunpack.c.l.b16 %v1901
        %v2037 = vunpack.c.l.b16 %v1902
        %v2038 = vunpack.c.l.b16 %v1903
        %v2039 = vunpack.c.l.b16 %v1904
        %v2040 = vunpack.c.l.b16 %v1905
        %v2041 = vunpack.c.l.b16 %v1906
        %v2042 = vunpack.c.l.b16 %v1907
        %v2043 = vunpack.c.l.b16 %v1908
        %v2044 = vunpack.c.l.b16 %v1909
        %v2045 = vunpack.c.l.b16 %v1910
        %v2046 = vunpack.c.l.b16 %v1911
        %v2047 = vunpack.c.l.b16 %v1912
        %v2048 = vunpack.c.l.b16 %v1913
        %v2049 = vunpack.c.l.b16 %v1914
        %v2050 = vunpack.c.l.b16 %v1915
        %v2051 = vunpack.c.l.b16 %v1916
        %v2052 = vunpack.c.l.b16 %v1917
        %v2053 = vunpack.c.l.b16 %v1918
        %v2054 = vunpack.c.l.b16 %v1919
        %v2055 = vunpack.c.l.b16 %v1920
        %v2056 = vunpack.c.l.b16 %v1921
        %v2057 = vunpack.c.l.b16 %v1922
        %v2058 = vunpack.c.l.b16 %v1923
        %v2059 = vunpack.c.l.b16 %v1924
        %v2060 = vunpack.c.l.b16 %v1925
        %v2061 = vunpack.c.l.b16 %v1926
        %v2062 = vunpack.c.l.b16 %v1927
        %v2063 = vunpack.c.l.b16 %v1928
        %v2064 = vunpack.c.l.b16 %v1929
        %v2065 = vunpack.c.l.b16 %v1930
        %v2066 = vunpack.c.l.b16 %v1931
        %v2067 = vunpack.c.l.b16 %v1932
        %v2068 = vunpack.c.l.b16 %v1933
        %v2069 = vunpack.c.l.b16 %v1934
        %v2070 = vunpack.c.l.b16 %v1935
        %v2071 = vunpack.c.l.b16 %v1936
        %v2072 = vunpack.c.l.b16 %v1937
        %v2073 = vunpack.c.l.b16 %v1938
        %v2074 = vunpack.c.l.b16 %v1939
        %v2075 = vunpack.c.l.b16 %v1940
        %v2076 = vunpack.c.l.b16 %v1941
        %v2077 = vunpack.c.l.b16 %v1942
        %v2078 = vunpack.c.l.b16 %v1943
        %v2079 = vunpack.c.l.b16 %v1944
        %v2080 = vunpack.c.l.b16 %v1945
        %v2081 = vunpack.c.l.b16 %v1946
        %v2082 = vunpack.c.l.b16 %v1947
        %v2083 = vunpack.c.l.b16 %v1948
        %v2084 = vunpack.c.l.b16 %v1949
        %v2085 = vunpack.c.l.b16 %v1950
        %v2086 = vunpack.c.l.b16 %v1951
        %v2087 = vunpack.c.l.b16 %v1952
        %v2088 = vunpack.c.l.b16 %v1953
        %v2089 = vunpack.c.l.b16 %v1954
        %v2090 = vunpack.c.l.b16 %v1955
        %v2091 = vunpack.c.l.b16 %v1956
        %v2092 = vpack.c.b16 %v2029, %v2028
        %v2093 = vpack.c.b16 %v2031, %v2030
        %v2094 = vpack.c.b16 %v2033, %v2032
        %v2095 = vpack.c.b16 %v2035, %v2034
        %v2096 = vpack.c.b16 %v2037, %v2036
        %v2097 = vpack.c.b16 %v2039, %v2038
        %v2098 = vpack.c.b16 %v2041, %v2040
        %v2099 = vpack.c.b16 %v2043, %v2042
        %v2100 = vpack.c.b16 %v2045, %v2044
        %v2101 = vpack.c.b16 %v2047, %v2046
        %v2102 = vpack.c.b16 %v2049, %v2048
        %v2103 = vpack.c.b16 %v2051, %v2050
        %v2104 = vpack.c.b16 %v2053, %v2052
        %v2105 = vpack.c.b16 %v2055, %v2054
        %v2106 = vpack.c.b16 %v2057, %v2056
        %v2107 = vpack.c.b16 %v2059, %v2058
        %v2108 = vpack.c.b16 %v2061, %v2060
        %v2109 = vpack.c.b16 %v2063, %v2062
        %v2110 = vpack.c.b16 %v2065, %v2064
        %v2111 = vpack.c.b16 %v2067, %v2066
        %v2112 = vpack.c.b16 %v2069, %v2068
        %v2113 = vpack.c.b16 %v2071, %v2070
        %v2114 = vpack.c.b16 %v2073, %v2072
        %v2115 = vpack.c.b16 %v2075, %v2074
        %v2116 = vpack.c.b16 %v2077, %v2076
        %v2117 = vpack.c.b16 %v2079, %v2078
        %v2118 = vpack.c.b16 %v2081, %v2080
        %v2119 = vpack.c.b16 %v2083, %v2082
        %v2120 = vpack.c.b16 %v2085, %v2084
        %v2121 = vpack.c.b16 %v2087, %v2086
        %v2122 = vpack.c.b16 %v2089, %v2088
        %v2123 = vpack.c.b16 %v2091, %v2090
        %2156 = vmatprep.subr.bf16.mxu0 0
        %2157 = vmatpush1.bf16.msra.mxu0 %v2099
        %2158 = vmatprep.subr.bf16.mxu0 0
        %2159 = vmatpush1.bf16.msra.mxu0 %v2098
        %2160 = vmatprep.subr.bf16.mxu0 0
        %2161 = vmatpush1.bf16.msra.mxu0 %v2097
        %2162 = vmatprep.subr.bf16.mxu0 0
        %2163 = vmatpush1.bf16.msra.mxu0 %v2096
        %2164 = vmatprep.subr.bf16.mxu0 0
        %2165 = vmatpush1.bf16.msra.mxu0 %v2095
        %2166 = vmatprep.subr.bf16.mxu0 0
        %2167 = vmatpush1.bf16.msra.mxu0 %v2094
        %2168 = vmatprep.subr.bf16.mxu0 0
        %2169 = vmatpush1.bf16.msra.mxu0 %v2093
        %2170 = vmatprep.subr.bf16.mxu0 0
        %2171 = vmatpush1.bf16.msra.mxu0 %v2092
        %2172 = vmatprep.subr.bf16.mxu0 0
        %2173 = vmatpush2.bf16.msra.mxu0 %v2107
        %2174 = vmatprep.subr.bf16.mxu0 0
        %2175 = vmatpush2.bf16.msra.mxu0 %v2106
        %2176 = vmatprep.subr.bf16.mxu0 0
        %2177 = vmatpush2.bf16.msra.mxu0 %v2105
        %2178 = vmatprep.subr.bf16.mxu0 0
        %2179 = vmatpush2.bf16.msra.mxu0 %v2104
        %2180 = vmatprep.subr.bf16.mxu0 0
        %2181 = vmatpush2.bf16.msra.mxu0 %v2103
        %2182 = vmatprep.subr.bf16.mxu0 0
        %2183 = vmatpush2.bf16.msra.mxu0 %v2102
        %2184 = vmatprep.subr.bf16.mxu0 0
        %2185 = vmatpush2.bf16.msra.mxu0 %v2101
        %2186 = vmatprep.subr.bf16.mxu0 0
        %2187 = vmatpush2.bf16.msra.mxu0 %v2100
        %2188 = vmatprep.mubr.bf16.mxu0 %v1878
        %2189 = vmatmul.mubr.bf16.gmra.mxu0 %v1877
        %v2190 = vpop.f32.mrf.mxu0
        %v2191 = vadd.f32 %v1962, %v2190
        %v2192 = vpop.f32.mrf.mxu0
        %v2193 = vpop.f32.mrf.mxu0
        %v2194 = vadd.f32 %v1962, %v2193
        %v2195 = vpop.f32.mrf.mxu0
        %2196 = vmatprep.mubr.bf16.mxu0 %v1882
        %2197 = vmatmul.mubr.bf16.gmra.mxu0 %v1881
        %v2198 = vpop.f32.mrf.mxu0
        %v2199 = vadd.f32 %v1962, %v2198
        %v2200 = vpop.f32.mrf.mxu0
        %v2201 = vpop.f32.mrf.mxu0
        %v2202 = vadd.f32 %v1962, %v2201
        %v2203 = vpop.f32.mrf.mxu0
        %2204 = vmatprep.mubr.bf16.mxu0 %v1886
        %2205 = vmatmul.mubr.bf16.gmra.mxu0 %v1885
        %v2206 = vpop.f32.mrf.mxu0
        %v2207 = vadd.f32 %v1962, %v2206
        %v2208 = vpop.f32.mrf.mxu0
        %v2209 = vpop.f32.mrf.mxu0
        %v2210 = vadd.f32 %v1962, %v2209
        %v2211 = vpop.f32.mrf.mxu0
        %2212 = vmatprep.mubr.bf16.mxu0 %v1890
        %2213 = vmatmul.mubr.bf16.gmra.mxu0 %v1889
        %v2214 = vpop.f32.mrf.mxu0
        %v2215 = vadd.f32 %v1962, %v2214
        %v2216 = vpop.f32.mrf.mxu0
        %v2217 = vpop.f32.mrf.mxu0
        %v2218 = vadd.f32 %v1962, %v2217
        %v2219 = vpop.f32.mrf.mxu0
        %2220 = vdwg.mxu0
        %2221 = vmatprep.subr.bf16.mxu0 0
        %2222 = vmatpush1.bf16.msra.mxu0 %v2115
        %2223 = vmatprep.subr.bf16.mxu0 0
        %2224 = vmatpush1.bf16.msra.mxu0 %v2114
        %2225 = vmatprep.subr.bf16.mxu0 0
        %2226 = vmatpush1.bf16.msra.mxu0 %v2113
        %2227 = vmatprep.subr.bf16.mxu0 0
        %2228 = vmatpush1.bf16.msra.mxu0 %v2112
        %2229 = vmatprep.subr.bf16.mxu0 0
        %2230 = vmatpush1.bf16.msra.mxu0 %v2111
        %2231 = vmatprep.subr.bf16.mxu0 0
        %2232 = vmatpush1.bf16.msra.mxu0 %v2110
        %2233 = vmatprep.subr.bf16.mxu0 0
        %2234 = vmatpush1.bf16.msra.mxu0 %v2109
        %2235 = vmatprep.subr.bf16.mxu0 0
        %2236 = vmatpush1.bf16.msra.mxu0 %v2108
        %2237 = vmatprep.subr.bf16.mxu0 0
        %2238 = vmatpush2.bf16.msra.mxu0 %v2123
        %2239 = vmatprep.subr.bf16.mxu0 0
        %2240 = vmatpush2.bf16.msra.mxu0 %v2122
        %2241 = vmatprep.subr.bf16.mxu0 0
        %2242 = vmatpush2.bf16.msra.mxu0 %v2121
        %2243 = vmatprep.subr.bf16.mxu0 0
        %2244 = vmatpush2.bf16.msra.mxu0 %v2120
        %2245 = vmatprep.subr.bf16.mxu0 0
        %2246 = vmatpush2.bf16.msra.mxu0 %v2119
        %2247 = vmatprep.subr.bf16.mxu0 0
        %2248 = vmatpush2.bf16.msra.mxu0 %v2118
        %2249 = vmatprep.subr.bf16.mxu0 0
        %2250 = vmatpush2.bf16.msra.mxu0 %v2117
        %2251 = vmatprep.subr.bf16.mxu0 0
        %2252 = vmatpush2.bf16.msra.mxu0 %v2116
        %2253 = vmatprep.mubr.bf16.mxu0 %v1880
        %2254 = vmatmul.mubr.bf16.gmra.mxu0 %v1879
        %v2255 = vpop.f32.mrf.mxu0
        %v2256 = vadd.f32 %v2191, %v2255
        %v2257 = vpop.f32.mrf.mxu0
        %v2258 = vpop.f32.mrf.mxu0
        %v2259 = vadd.f32 %v2194, %v2258
        %v2260 = vpop.f32.mrf.mxu0
        %2261 = vmatprep.mubr.bf16.mxu0 %v1884
        %2262 = vmatmul.mubr.bf16.gmra.mxu0 %v1883
        %v2263 = vpop.f32.mrf.mxu0
        %v2264 = vadd.f32 %v2199, %v2263
        %v2265 = vpop.f32.mrf.mxu0
        %v2266 = vpop.f32.mrf.mxu0
        %v2267 = vadd.f32 %v2202, %v2266
        %v2268 = vpop.f32.mrf.mxu0
        %2269 = vmatprep.mubr.bf16.mxu0 %v1888
        %2270 = vmatmul.mubr.bf16.gmra.mxu0 %v1887
        %v2271 = vpop.f32.mrf.mxu0
        %v2272 = vadd.f32 %v2207, %v2271
        %v2273 = vpop.f32.mrf.mxu0
        %v2274 = vpop.f32.mrf.mxu0
        %v2275 = vadd.f32 %v2210, %v2274
        %v2276 = vpop.f32.mrf.mxu0
        %2277 = vmatprep.mubr.bf16.mxu0 %v1892
        %2278 = vmatmul.mubr.bf16.gmra.mxu0 %v1891
        %v2279 = vpop.f32.mrf.mxu0
        %v2280 = vadd.f32 %v2215, %v2279
        %v2281 = vpop.f32.mrf.mxu0
        %v2282 = vpop.f32.mrf.mxu0
        %v2283 = vadd.f32 %v2218, %v2282
        %v2284 = vpop.f32.mrf.mxu0
        %2285 = vdwg.mxu0
        %v2302 = vrot.slane %v379, 1
        %v2303 = vrot.slane %v380, 1
        %v2304 = vsel %vm543, %v2302, %v2303
        %v2305 = vrot.slane %v381, 1
        %v2306 = vrot.slane %v382, 1
        %v2307 = vsel %vm543, %v2305, %v2306
        %v2308 = vrot.slane %v383, 1
        %v2309 = vrot.slane %v384, 1
        %v2310 = vsel %vm543, %v2308, %v2309
        %v2311 = vrot.slane %v385, 1
        %v2312 = vrot.slane %v386, 1
        %v2313 = vsel %vm543, %v2311, %v2312
        %v2314 = vrot.slane %v387, 1
        %v2315 = vrot.slane %v388, 1
        %v2316 = vsel %vm543, %v2314, %v2315
        %v2317 = vrot.slane %v389, 1
        %v2318 = vrot.slane %v390, 1
        %v2319 = vsel %vm543, %v2317, %v2318
        %v2320 = vrot.slane %v391, 1
        %v2321 = vrot.slane %v392, 1
        %v2322 = vsel %vm543, %v2320, %v2321
        %v2323 = vrot.slane %v393, 1
        %v2324 = vrot.slane %v394, 1
        %v2325 = vsel %vm543, %v2323, %v2324
        %v2334 = vadd.f32 %v2304, %v2256
        %v2335 = vadd.f32 %v2307, %v2259
        %v2336 = vadd.f32 %v2310, %v2264
        %v2337 = vadd.f32 %v2313, %v2267
        %v2338 = vadd.f32 %v2316, %v2272
        %v2339 = vadd.f32 %v2319, %v2275
        %v2340 = vadd.f32 %v2322, %v2280
        %v2341 = vadd.f32 %v2325, %v2283
        %2342 = vst [vmem:[%s366] sm:$0xff] %v2334
        %2343 = vst [vmem:[%s366 + $0x8] sm:$0xff] %v2335
        %2344 = vst [vmem:[%s366 + $0x10] sm:$0xff] %v2336
        %2345 = vst [vmem:[%s366 + $0x18] sm:$0xff] %v2337
        %2346 = vst [vmem:[%s366 + $0x20] sm:$0xff] %v2338
        %2347 = vst [vmem:[%s366 + $0x28] sm:$0xff] %v2339
        %2348 = vst [vmem:[%s366 + $0x30] sm:$0xff] %v2340
        %2349 = vst [vmem:[%s366 + $0x38] sm:$0xff] %v2341
        %s2350 = sand.u32 %s221, 1
        %s2351 = scalar_lea.sflag [#allocation4], %s2350
        %s2352 = sand.u32 %s221, 1
        %s2353 = smul.addr %s2352, 64
        %s2354 = scalar_lea.vmem [#allocation8], %s2353
        // Predicated region
        $region65: #{tpu_custom_call.1} parent=51 // pred_check
          %p2355 = pneg %p231
        $region66: #{tpu_custom_call.1} parent=51 // pred_check_branch
          %2357 = sbr.rel (%p2355) target = $region68
        $region67: #{tpu_custom_call.1} parent=51 // pred_region
          %s2359 = ssub.s32 1024, 1024
          %2360 = vsyncadd %s2351, %s2359
          %s2361 = smul.addr %s28, 8
          %s2362 = smul.addr %s29, 8
          %s2363 = sadd.s32 %s2361, %s2362
          %s2364 = smul.addr %s2363, 128
          %s2365 = scalar_lea.hbm %s8, %s2364
          %s2366 = sshll.u32 %s2354, 4
          %s2367 = int_to_ptr.vmem [resolvable:$true] %s2366
          %2372 = dma.vmem_to_hbm [thread:$0]  %s2367, 1024, %s2365, %s2351, 128, 128, 8
        $region68: #{tpu_custom_call.1} parent=51 // pred_fallthru
          _
      $region52: #{tpu_custom_call.1} parent=5 // pred_fallthru
        _
      %p2373 = scmp.le.s32.totalorder 2, %s19
      // Predicated region
      $region69: #{tpu_custom_call.1} parent=5 // pred_check
        %p2374 = pneg %p2373
      $region70: #{tpu_custom_call.1} parent=5 // pred_check_branch
        %2376 = sbr.rel (%p2374) target = $region72
      $region71: #{tpu_custom_call.1} parent=5 // pred_region
        %s2377 = ssub.s32 %s19, 2
        // Predicated region
        $region73: #{tpu_custom_call.1} parent=71 // pred_check
          %p2378 = pneg %p237
        $region74: #{tpu_custom_call.1} parent=71 // pred_check_branch
          %2380 = sbr.rel (%p2378) target = $region76
        $region75: #{tpu_custom_call.1} parent=71 // pred_region
          %s2381 = sand.u32 %s222, 1
          %s2382 = scalar_lea.sflag [#allocation4], %s2381
          %s2383 = sand.u32 %s222, 1
          %s2384 = smul.addr %s2383, 64
          %s2385 = scalar_lea.vmem [#allocation8], %s2384
          %2386 = dma.done %s2382, 1024
        $region76: #{tpu_custom_call.1} parent=71 // pred_fallthru
          _
      $region72: #{tpu_custom_call.1} parent=5 // pred_fallthru
        _
    $region6: #{tpu_custom_call.1} parent=1 // loop_footer
      %s23 = sadd.s32 1, %s19
    $region7: #{tpu_custom_call.1} parent=1 // loop_footer_branch
      %18 = sbr.rel target = $region3
    $region8: #{tpu_custom_call.1} parent=1 // loop_exit
      _
    %2387 = vsyncpa [#allocation3], 1
    %s2388 = scalar_lea.sflag [#allocation3], 1
    %2389 = vsyncpa %s2388, 1
    %2390 = vsyncpa [#allocation6], 1
    %2391 = vsyncpa [#allocation4], 1
    %s2392 = scalar_lea.sflag [#allocation4], 1
    %2393 = vsyncpa %s2392, 1

</llo_original>
